<compile_context>
chip_gen: v7x
topology: tpu7x:2x2x1
jax: 0.10.0
libtpu: 0.0.40
codegen_flags: <defaults>
</compile_context>

<pallas_src>
import functools

import jax
import jax.numpy as jnp
from jax import lax
from jax.experimental import pallas as pl
from jax.experimental.pallas import tpu as pltpu

EPSILON = 1e-8


def _round_up(x, m):
    return ((x + m - 1) // m) * m


def _vmem_capacity_bytes():
    try:
        return int(pltpu.get_tpu_info().vmem_capacity_bytes)
    except Exception:
        return 128 * 1024 * 1024  # v5e/v6e default if the query is unavailable


def _choose_a_chunk(A, M_pad, slab_budget_bytes=2 << 20):
    """Bound the live (a_chunk, M_pad) selector slabs to a few MiB."""
    cap = max(8, slab_budget_bytes // (4 * M_pad))
    if A <= cap:
        return A
    return max(8, (cap // 8) * 8)


def _choose_block_b(B, A, M_pad, a_chunk, has_mask, store_vecs, vmem_limit):
    """Molecules per grid step: sublane-dense (multiple of 8), sized to a VMEM
    budget (double-buffered I/O blocks + accumulator + selector slabs), and kept
    small enough that there are >= ~8 grid steps for pipelining / megacore."""
    if B <= 8:
        return B
    a_vmem = _round_up(A, 128)
    per_mol_io = (8 * a_vmem * 4                 # atoms block (3->8 sublane pad)
                  + M_pad * 4                    # neighbor indices
                  + (M_pad * 4 if has_mask else 0)
                  + M_pad * 4                    # distances
                  + (8 * M_pad * 4 if store_vecs else 0))   # dvec output block
    per_mol = 2 * per_mol_io + (0 if store_vecs else 8 * M_pad * 4)  # + scratch
    sel_bytes = 6 * a_chunk * M_pad * 4          # live selector slabs per chunk
    budget = max(1 << 20, int(0.6 * vmem_limit) - sel_bytes)
    cap = max(1, budget // per_mol)
    bb = min(cap, max(8, B // 8))                # >= ~8 grid steps when B allows
    bb = max(8, (bb // 8) * 8)
    while bb > 8 and B % bb != 0:                # prefer no partial last block
        bb -= 8
    return min(bb, B)


def _shell_kernel(*refs, block_b, A, N, M_pad, chunks, has_mask, store_vecs,
                  normalize_vecs, approx_recip):
    """Per-grid-step refs (block_b molecules, M_pad = 128-padded A*N):
         atoms_ref: (block_b, 3, A)      f32   transposed coordinates
         nbr_ref:   (block_b, M_pad)     i32   flattened, padded neighbor table
        [mask_ref:  (block_b, M_pad)     i32]  only if has_mask
         dist_ref:  (block_b, M_pad)     f32
         vec_ref:   (block_b, 3, M_pad)  f32   dvec output (if store_vecs) else scratch
    """
    atoms_ref, nbr_ref = refs[0], refs[1]
    pos = 2
    mask_ref = None
    if has_mask:
        mask_ref = refs[pos]
        pos += 1
    dist_ref = refs[pos]
    pos += 1
    vec_ref = refs[pos]  # dvec output block if store_vecs, else VMEM scratch

    def run_chunk(ci, c0, clen):
        # ---- molecule-invariant selector pieces: built ONCE per chunk ----
        #   sel[k, m] = (nbr[m] == c0+k) - (m // N == c0+k)
        # so atoms_chunk @ sel = atoms[nbr[m]] - atoms[center(m)], i.e. the
        # neighbor gather and center subtraction fused into one MXU matmul.
        # NOTE: out-of-range / negative (padded) neighbor indices never match
        # the one-hot; such slots must be covered by neighbor_mask — same
        # convention as the PyTorch gather with mask-handled padding.
        k_iota = lax.broadcasted_iota(jnp.int32, (clen, M_pad), 0) + c0
        m_iota = lax.broadcasted_iota(jnp.int32, (clen, M_pad), 1)
        k_n = k_iota * N
        center_f = jnp.logical_and(m_iota >= k_n, m_iota < k_n + N).astype(jnp.float32)
        one_minus_c = 1.0 - center_f
        neg_c = 0.0 - center_f

        @pl.loop(0, block_b, unroll=block_b <= 8)
        def _(b):
            # per-molecule work: one compare + one select, then the matmul
            nbr_row = nbr_ref[pl.ds(b, 1), :]                          # (1, M_pad)
            sel = jnp.where(k_iota == nbr_row, one_minus_c, neg_c)     # (clen, M_pad)
            atoms_b = atoms_ref[b]                                     # (3, A)
            atoms_c = atoms_b if clen == A else atoms_b[:, c0:c0 + clen]
            partial = jnp.dot(atoms_c, sel,
                              preferred_element_type=jnp.float32)      # (3, M_pad)
            if ci == 0:
                vec_ref[b] = partial
            else:
                vec_ref[b] = vec_ref[b] + partial

    for ci, (c0, clen) in enumerate(chunks):   # static, fully unrolled chunk loop
        run_chunk(ci, c0, clen)

    # ---- vectorized epilogue over all block_b molecules (dense (bb, M_pad)) ----
    acc = vec_ref[...]                          # (block_b, 3, M_pad)
    dx = acc[:, 0, :]
    dy = acc[:, 1, :]
    dz = acc[:, 2, :]
    dist = jnp.sqrt(dx * dx + dy * dy + dz * dz)            # (block_b, M_pad)

    if has_mask:
        valid = mask_ref[...] != 0
        dist = jnp.where(valid, dist, 0.0)
    dist_ref[...] = dist                                     # full-vreg store

    if store_vecs and normalize_vecs:
        if has_mask:
            denom = jnp.where(valid, dist + EPSILON, 1.0)
        else:
            # PyTorch would error on neighbor_mask=None here; treat it as an
            # all-ones mask (normalize everything).
            denom = dist + EPSILON
        inv = pl.reciprocal(denom, approx=approx_recip)
        vec_ref[...] = acc * inv[:, None, :]
    # (store_vecs without normalization: data already sits in the output block)


def shell_provider(atoms, neighbors, neighbor_mask=None, *,
                   return_vecs=False, normalize_vecs=False,
                   vecs_channel_first=False, approx_recip=False,
                   block_b=None, a_chunk=None):
    """Pallas implementation of ShellProvider.forward (pbc=False, cutoff=None).

    vecs_channel_first=True returns the distance vectors as (B, 3, A, N)
    (a free reshape of the kernel layout, no HBM transpose); the default
    matches the PyTorch module's (B, A, N, 3).
    """
    B, A, _ = atoms.shape
    N = neighbors.shape[2]
    M = A * N
    M_pad = _round_up(M, 128)

    has_mask = neighbor_mask is not None
    store_vecs = bool(return_vecs)

    vmem_cap = _vmem_capacity_bytes()
    vmem_limit = min(int(0.75 * vmem_cap), 96 * 1024 * 1024)

    ac = _choose_a_chunk(A, M_pad) if a_chunk is None else max(1, int(a_chunk))
    ac = min(ac, A)
    chunks = tuple((c0, min(ac, A - c0)) for c0 in range(0, A, ac))

    if block_b is None:
        bb = _choose_block_b(B, A, M_pad, ac, has_mask, store_vecs, vmem_limit)
    else:
        bb = max(1, min(int(block_b), B))
        if bb < B and bb % 8 != 0:          # keep sublane-dense / tiling-legal
            bb = min(B, _round_up(bb, 8))

    # Lane-dense operands: coordinates transposed to (B, 3, A); neighbor table
    # (and optional int32 mask) flattened to (B, M) and padded to 128 lanes.
    atoms_t = jnp.transpose(atoms.astype(jnp.float32), (0, 2, 1))
    nbr = neighbors.astype(jnp.int32).reshape(B, M)
    if M_pad != M:
        nbr = jnp.pad(nbr, ((0, 0), (0, M_pad - M)), constant_values=-1)

    inputs = [atoms_t, nbr]
    in_specs = [
        pl.BlockSpec((bb, 3, A), lambda i: (i, 0, 0)),
        pl.BlockSpec((bb, M_pad), lambda i: (i, 0)),
    ]
    if has_mask:
        mask = (neighbor_mask != 0).astype(jnp.int32).reshape(B, M)
        if M_pad != M:
            mask = jnp.pad(mask, ((0, 0), (0, M_pad - M)))
        inputs.append(mask)
        in_specs.append(pl.BlockSpec((bb, M_pad), lambda i: (i, 0)))

    out_shape = [jax.ShapeDtypeStruct((B, M_pad), jnp.float32)]
    out_specs = [pl.BlockSpec((bb, M_pad), lambda i: (i, 0))]
    if store_vecs:
        out_shape.append(jax.ShapeDtypeStruct((B, 3, M_pad), jnp.float32))
        out_specs.append(pl.BlockSpec((bb, 3, M_pad), lambda i: (i, 0, 0)))

    # When dvec is not requested, a VMEM scratch plays the accumulator role.
    scratch_shapes = [] if store_vecs else [pltpu.VMEM((bb, 3, M_pad), jnp.float32)]

    kernel = functools.partial(
        _shell_kernel, block_b=bb, A=A, N=N, M_pad=M_pad, chunks=chunks,
        has_mask=has_mask, store_vecs=store_vecs,
        normalize_vecs=bool(return_vecs and normalize_vecs),
        approx_recip=bool(approx_recip))

    outs = pl.pallas_call(
        kernel,
        out_shape=tuple(out_shape),
        grid_spec=pltpu.PrefetchScalarGridSpec(
            num_scalar_prefetch=0,
            grid=(pl.cdiv(B, bb),),
            in_specs=in_specs,
            out_specs=out_specs,
            scratch_shapes=scratch_shapes,
        ),
        compiler_params=pltpu.CompilerParams(
            dimension_semantics=("parallel",),
            vmem_limit_bytes=vmem_limit),
    )(*inputs)

    dist_flat = outs[0]
    if M_pad != M:
        dist_flat = dist_flat[:, :M]
    distances = dist_flat.reshape(B, A, N)

    # TODO(synk): pbc=True (27 lattice shifts) and cutoff!=None (ragged,
    # data-dependent output shapes) have no static-shape Pallas equivalent.

    if return_vecs:
        dvec_flat = outs[1]
        if M_pad != M:
            dvec_flat = dvec_flat[:, :, :M]
        dvec = dvec_flat.reshape(B, 3, A, N)
        if not vecs_channel_first:
            # Restore the module's (B, A, N, 3) layout (HBM relayout; pass
            # vecs_channel_first=True to skip it for channel-first consumers).
            dvec = jnp.transpose(dvec, (0, 2, 3, 1))
        return distances, dvec, neighbors, neighbor_mask
    return distances, neighbors, neighbor_mask


if __name__ == "__main__":
    key = jax.random.PRNGKey(0)
    k1, k2, k3 = jax.random.split(key, 3)

    # --- case 1: B=16, A=8, N=7 (M=56 -> padded to 128 lanes), all variants ---
    B, A = 16, 8
    N = A - 1  # small-system convention: all other atoms are neighbors
    atoms = jax.random.normal(k1, (B, A, 3), dtype=jnp.float32)
    nbr_base = (jnp.arange(A)[:, None] + jnp.arange(1, A)[None, :]) % A
    neighbors = jnp.tile(nbr_base[None, :, :], (B, 1, 1)).astype(jnp.int32)
    neighbor_mask = (jax.random.uniform(k2, (B, A, N)) > 0.2).astype(jnp.float32)

    # Full-compute variant (return_vecs + normalize_vecs, with mask, exact recip)
    dist, dvec, _, _ = shell_provider(atoms, neighbors, neighbor_mask,
                                      return_vecs=True, normalize_vecs=True)
    # Default path (distances only, with mask)
    dist_only, _, _ = shell_provider(atoms, neighbors, neighbor_mask)
    # No-mask variant — no mask operand DMA'd at all
    dist_nomask, _, _ = shell_provider(atoms, neighbors)
    # Channel-first (no HBM transpose) + EUP approximate reciprocal fast path
    _, dvec_cf, _, _ = shell_provider(atoms, neighbors, neighbor_mask,
                                      return_vecs=True, normalize_vecs=True,
                                      vecs_channel_first=True, approx_recip=True)
    jax.block_until_ready((dist, dvec, dist_only, dist_nomask, dvec_cf))

    # Pure-JAX reference
    idx_m = jnp.arange(B)[:, None, None]
    ngh_ref = atoms[idx_m, neighbors]                       # (B, A, N, 3)
    dvec_raw = ngh_ref - atoms[:, :, None, :]
    dist_raw = jnp.sqrt(jnp.sum(dvec_raw ** 2, axis=-1))
    dist_ref = jnp.where(neighbor_mask != 0, dist_raw, 0.0)
    denom_ref = jnp.where(neighbor_mask != 0, dist_ref + EPSILON, 1.0)
    dvec_norm_ref = dvec_raw / denom_ref[..., None]

    assert jnp.allclose(dist, dist_ref, atol=1e-5), "distance mismatch"
    assert jnp.allclose(dvec, dvec_norm_ref, atol=1e-5), "distance-vector mismatch"
    assert jnp.allclose(dist_only, dist_ref, atol=1e-5), "default-path mismatch"
    assert jnp.allclose(dist_nomask, dist_raw, atol=1e-5), "no-mask-path mismatch"
    # approx reciprocal + channel-first layout: loose tolerance (EUP approx path)
    assert dvec_cf.shape == (B, 3, A, N)
    assert jnp.allclose(jnp.transpose(dvec_cf, (0, 2, 3, 1)), dvec_norm_ref,
                        rtol=2e-2, atol=2e-2), "approx/channel-first mismatch"

    # --- case 2: multi-chunk accumulation path (explicit a_chunk), B <= 8 ---
    B2, A2, N2 = 4, 20, 10
    atoms2 = jax.random.normal(k3, (B2, A2, 3), dtype=jnp.float32)
    neighbors2 = (jnp.arange(A2)[:, None] + jnp.arange(1, N2 + 1)[None, :]) % A2
    neighbors2 = jnp.tile(neighbors2[None], (B2, 1, 1)).astype(jnp.int32)
    mask2 = jnp.ones((B2, A2, N2), dtype=jnp.float32)
    d2, v2, _, _ = shell_provider(atoms2, neighbors2, mask2,
                                  return_vecs=True, normalize_vecs=False,
                                  a_chunk=8)     # 3 chunks: (0,8),(8,8),(16,4)
    jax.block_until_ready((d2, v2))
    ngh2 = atoms2[jnp.arange(B2)[:, None, None], neighbors2]
    dvec2_ref = ngh2 - atoms2[:, :, None, :]
    dist2_ref = jnp.sqrt(jnp.sum(dvec2_ref ** 2, axis=-1))
    assert jnp.allclose(d2, dist2_ref, atol=1e-5), "chunked distance mismatch"
    assert jnp.allclose(v2, dvec2_ref, atol=1e-5), "chunked vector mismatch"

    print("KERNEL_OK")
</pallas_src>

<mosaic_0001>
module attributes {stable_mosaic.version = 11 : i64} {
  func.func @_shell_kernel(%arg0: i32, %arg1: memref<8x3x8xf32, #tpu.memory_space<vmem>>, %arg2: memref<8x128xi32, #tpu.memory_space<vmem>>, %arg3: memref<8x128xi32, #tpu.memory_space<vmem>>, %arg4: memref<8x128xf32, #tpu.memory_space<vmem>>, %arg5: memref<8x3x128xf32, #tpu.memory_space<vmem>>) attributes {dimension_semantics = [#tpu.dimension_semantics<parallel>], iteration_bounds = array<i64: 2>, scalar_prefetch = 0 : i64, scratch_operands = 0 : i64, tpu.core_type = #tpu.core_type<tc>, window_params = [{transform_indices = @transform_0, window_bounds = array<i64: 8, 3, 8>}, {transform_indices = @transform_1, window_bounds = array<i64: 8, 128>}, {transform_indices = @transform_2, window_bounds = array<i64: 8, 128>}, {transform_indices = @transform_3, window_bounds = array<i64: 8, 128>}, {transform_indices = @transform_4, window_bounds = array<i64: 8, 3, 128>}]} {
    %0 = tpu.iota {dimensions = array<i32: 0>} : vector<8x128xi32>
    %c0_i32 = arith.constant 0 : i32
    %1 = vector.broadcast %c0_i32 : i32 to vector<8x128xi32>
    %2 = arith.addi %0, %1 : vector<8x128xi32>
    %3 = tpu.iota {dimensions = array<i32: 1>} : vector<8x128xi32>
    %c7_i32 = arith.constant 7 : i32
    %4 = vector.broadcast %c7_i32 : i32 to vector<8x128xi32>
    %5 = arith.muli %2, %4 : vector<8x128xi32>
    %6 = arith.cmpi sge, %3, %5 : vector<8x128xi32>
    %c7_i32_0 = arith.constant 7 : i32
    %7 = vector.broadcast %c7_i32_0 : i32 to vector<8x128xi32>
    %8 = arith.addi %5, %7 : vector<8x128xi32>
    %9 = arith.cmpi slt, %3, %8 : vector<8x128xi32>
    %10 = arith.andi %6, %9 : vector<8x128xi1>
    %11 = arith.extui %10 : vector<8x128xi1> to vector<8x128xi32>
    %12 = arith.sitofp %11 : vector<8x128xi32> to vector<8x128xf32>
    %cst = arith.constant 1.000000e+00 : f32
    %13 = vector.broadcast %cst : f32 to vector<8x128xf32>
    %14 = arith.subf %13, %12 : vector<8x128xf32>
    %cst_1 = arith.constant 0.000000e+00 : f32
    %15 = vector.broadcast %cst_1 : f32 to vector<8x128xf32>
    %16 = arith.subf %15, %12 : vector<8x128xf32>
    %c0_i32_2 = arith.constant 0 : i32
    %c1_i32 = arith.constant 1 : i32
    %17 = arith.muli %c0_i32_2, %c1_i32 : i32
    %c0_i32_3 = arith.constant 0 : i32
    %18 = arith.addi %c0_i32_3, %17 : i32
    %19 = arith.index_cast %18 : i32 to index
    %c0 = arith.constant 0 : index
    %20 = vector.load %arg2[%19, %c0] : memref<8x128xi32, #tpu.memory_space<vmem>>, vector<1x128xi32>
    %21 = vector.broadcast %20 : vector<1x128xi32> to vector<8x128xi32>
    %22 = arith.cmpi eq, %2, %21 : vector<8x128xi32>
    %23 = arith.select %22, %14, %16 : vector<8x128xi1>, vector<8x128xf32>
    %24 = arith.index_cast %18 : i32 to index
    %c0_4 = arith.constant 0 : index
    %c0_5 = arith.constant 0 : index
    %25 = vector.load %arg1[%24, %c0_4, %c0_5] : memref<8x3x8xf32, #tpu.memory_space<vmem>>, vector<1x3x8xf32>
    %26 = vector.shape_cast %25 : vector<1x3x8xf32> to vector<3x8xf32>
    %cst_6 = arith.constant dense<0.000000e+00> : vector<3x128xf32>
    %27 = tpu.matmul %26, %23, %cst_6 {dimension_numbers = #tpu.dot_dimension_numbers<[1], [0], [0], [1], [0, 0, 1, 1], [], []>} : vector<3x8xf32>, vector<8x128xf32>, vector<3x128xf32> -> vector<3x128xf32>
    %28 = arith.index_cast %18 : i32 to index
    %c0_7 = arith.constant 0 : index
    %c0_8 = arith.constant 0 : index
    %29 = vector.load %arg5[%28, %c0_7, %c0_8] : memref<8x3x128xf32, #tpu.memory_space<vmem>>, vector<1x3x128xf32>
    %30 = vector.shape_cast %29 : vector<1x3x128xf32> to vector<3x128xf32>
    %31 = vector.shape_cast %27 : vector<3x128xf32> to vector<1x3x128xf32>
    tpu.vector_store %arg5[%28, %c0_7, %c0_8], %31 {strides = array<i32>} : memref<8x3x128xf32, #tpu.memory_space<vmem>>, vector<1x3x128xf32>,
    %c1_i32_9 = arith.constant 1 : i32
    %c1_i32_10 = arith.constant 1 : i32
    %32 = arith.muli %c1_i32_9, %c1_i32_10 : i32
    %c0_i32_11 = arith.constant 0 : i32
    %33 = arith.addi %c0_i32_11, %32 : i32
    %34 = arith.index_cast %33 : i32 to index
    %c0_12 = arith.constant 0 : index
    %35 = vector.load %arg2[%34, %c0_12] : memref<8x128xi32, #tpu.memory_space<vmem>>, vector<1x128xi32>
    %36 = vector.broadcast %35 : vector<1x128xi32> to vector<8x128xi32>
    %37 = arith.cmpi eq, %2, %36 : vector<8x128xi32>
    %38 = arith.select %37, %14, %16 : vector<8x128xi1>, vector<8x128xf32>
    %39 = arith.index_cast %33 : i32 to index
    %c0_13 = arith.constant 0 : index
    %c0_14 = arith.constant 0 : index
    %40 = vector.load %arg1[%39, %c0_13, %c0_14] : memref<8x3x8xf32, #tpu.memory_space<vmem>>, vector<1x3x8xf32>
    %41 = vector.shape_cast %40 : vector<1x3x8xf32> to vector<3x8xf32>
    %cst_15 = arith.constant dense<0.000000e+00> : vector<3x128xf32>
    %42 = tpu.matmul %41, %38, %cst_15 {dimension_numbers = #tpu.dot_dimension_numbers<[1], [0], [0], [1], [0, 0, 1, 1], [], []>} : vector<3x8xf32>, vector<8x128xf32>, vector<3x128xf32> -> vector<3x128xf32>
    %43 = arith.index_cast %33 : i32 to index
    %c0_16 = arith.constant 0 : index
    %c0_17 = arith.constant 0 : index
    %44 = vector.load %arg5[%43, %c0_16, %c0_17] : memref<8x3x128xf32, #tpu.memory_space<vmem>>, vector<1x3x128xf32>
    %45 = vector.shape_cast %44 : vector<1x3x128xf32> to vector<3x128xf32>
    %46 = vector.shape_cast %42 : vector<3x128xf32> to vector<1x3x128xf32>
    tpu.vector_store %arg5[%43, %c0_16, %c0_17], %46 {strides = array<i32>} : memref<8x3x128xf32, #tpu.memory_space<vmem>>, vector<1x3x128xf32>,
    %c2_i32 = arith.constant 2 : i32
    %c1_i32_18 = arith.constant 1 : i32
    %47 = arith.muli %c2_i32, %c1_i32_18 : i32
    %c0_i32_19 = arith.constant 0 : i32
    %48 = arith.addi %c0_i32_19, %47 : i32
    %49 = arith.index_cast %48 : i32 to index
    %c0_20 = arith.constant 0 : index
    %50 = vector.load %arg2[%49, %c0_20] : memref<8x128xi32, #tpu.memory_space<vmem>>, vector<1x128xi32>
    %51 = vector.broadcast %50 : vector<1x128xi32> to vector<8x128xi32>
    %52 = arith.cmpi eq, %2, %51 : vector<8x128xi32>
    %53 = arith.select %52, %14, %16 : vector<8x128xi1>, vector<8x128xf32>
    %54 = arith.index_cast %48 : i32 to index
    %c0_21 = arith.constant 0 : index
    %c0_22 = arith.constant 0 : index
    %55 = vector.load %arg1[%54, %c0_21, %c0_22] : memref<8x3x8xf32, #tpu.memory_space<vmem>>, vector<1x3x8xf32>
    %56 = vector.shape_cast %55 : vector<1x3x8xf32> to vector<3x8xf32>
    %cst_23 = arith.constant dense<0.000000e+00> : vector<3x128xf32>
    %57 = tpu.matmul %56, %53, %cst_23 {dimension_numbers = #tpu.dot_dimension_numbers<[1], [0], [0], [1], [0, 0, 1, 1], [], []>} : vector<3x8xf32>, vector<8x128xf32>, vector<3x128xf32> -> vector<3x128xf32>
    %58 = arith.index_cast %48 : i32 to index
    %c0_24 = arith.constant 0 : index
    %c0_25 = arith.constant 0 : index
    %59 = vector.load %arg5[%58, %c0_24, %c0_25] : memref<8x3x128xf32, #tpu.memory_space<vmem>>, vector<1x3x128xf32>
    %60 = vector.shape_cast %59 : vector<1x3x128xf32> to vector<3x128xf32>
    %61 = vector.shape_cast %57 : vector<3x128xf32> to vector<1x3x128xf32>
    tpu.vector_store %arg5[%58, %c0_24, %c0_25], %61 {strides = array<i32>} : memref<8x3x128xf32, #tpu.memory_space<vmem>>, vector<1x3x128xf32>,
    %c3_i32 = arith.constant 3 : i32
    %c1_i32_26 = arith.constant 1 : i32
    %62 = arith.muli %c3_i32, %c1_i32_26 : i32
    %c0_i32_27 = arith.constant 0 : i32
    %63 = arith.addi %c0_i32_27, %62 : i32
    %64 = arith.index_cast %63 : i32 to index
    %c0_28 = arith.constant 0 : index
    %65 = vector.load %arg2[%64, %c0_28] : memref<8x128xi32, #tpu.memory_space<vmem>>, vector<1x128xi32>
    %66 = vector.broadcast %65 : vector<1x128xi32> to vector<8x128xi32>
    %67 = arith.cmpi eq, %2, %66 : vector<8x128xi32>
    %68 = arith.select %67, %14, %16 : vector<8x128xi1>, vector<8x128xf32>
    %69 = arith.index_cast %63 : i32 to index
    %c0_29 = arith.constant 0 : index
    %c0_30 = arith.constant 0 : index
    %70 = vector.load %arg1[%69, %c0_29, %c0_30] : memref<8x3x8xf32, #tpu.memory_space<vmem>>, vector<1x3x8xf32>
    %71 = vector.shape_cast %70 : vector<1x3x8xf32> to vector<3x8xf32>
    %cst_31 = arith.constant dense<0.000000e+00> : vector<3x128xf32>
    %72 = tpu.matmul %71, %68, %cst_31 {dimension_numbers = #tpu.dot_dimension_numbers<[1], [0], [0], [1], [0, 0, 1, 1], [], []>} : vector<3x8xf32>, vector<8x128xf32>, vector<3x128xf32> -> vector<3x128xf32>
    %73 = arith.index_cast %63 : i32 to index
    %c0_32 = arith.constant 0 : index
    %c0_33 = arith.constant 0 : index
    %74 = vector.load %arg5[%73, %c0_32, %c0_33] : memref<8x3x128xf32, #tpu.memory_space<vmem>>, vector<1x3x128xf32>
    %75 = vector.shape_cast %74 : vector<1x3x128xf32> to vector<3x128xf32>
    %76 = vector.shape_cast %72 : vector<3x128xf32> to vector<1x3x128xf32>
    tpu.vector_store %arg5[%73, %c0_32, %c0_33], %76 {strides = array<i32>} : memref<8x3x128xf32, #tpu.memory_space<vmem>>, vector<1x3x128xf32>,
    %c4_i32 = arith.constant 4 : i32
    %c1_i32_34 = arith.constant 1 : i32
    %77 = arith.muli %c4_i32, %c1_i32_34 : i32
    %c0_i32_35 = arith.constant 0 : i32
    %78 = arith.addi %c0_i32_35, %77 : i32
    %79 = arith.index_cast %78 : i32 to index
    %c0_36 = arith.constant 0 : index
    %80 = vector.load %arg2[%79, %c0_36] : memref<8x128xi32, #tpu.memory_space<vmem>>, vector<1x128xi32>
    %81 = vector.broadcast %80 : vector<1x128xi32> to vector<8x128xi32>
    %82 = arith.cmpi eq, %2, %81 : vector<8x128xi32>
    %83 = arith.select %82, %14, %16 : vector<8x128xi1>, vector<8x128xf32>
    %84 = arith.index_cast %78 : i32 to index
    %c0_37 = arith.constant 0 : index
    %c0_38 = arith.constant 0 : index
    %85 = vector.load %arg1[%84, %c0_37, %c0_38] : memref<8x3x8xf32, #tpu.memory_space<vmem>>, vector<1x3x8xf32>
    %86 = vector.shape_cast %85 : vector<1x3x8xf32> to vector<3x8xf32>
    %cst_39 = arith.constant dense<0.000000e+00> : vector<3x128xf32>
    %87 = tpu.matmul %86, %83, %cst_39 {dimension_numbers = #tpu.dot_dimension_numbers<[1], [0], [0], [1], [0, 0, 1, 1], [], []>} : vector<3x8xf32>, vector<8x128xf32>, vector<3x128xf32> -> vector<3x128xf32>
    %88 = arith.index_cast %78 : i32 to index
    %c0_40 = arith.constant 0 : index
    %c0_41 = arith.constant 0 : index
    %89 = vector.load %arg5[%88, %c0_40, %c0_41] : memref<8x3x128xf32, #tpu.memory_space<vmem>>, vector<1x3x128xf32>
    %90 = vector.shape_cast %89 : vector<1x3x128xf32> to vector<3x128xf32>
    %91 = vector.shape_cast %87 : vector<3x128xf32> to vector<1x3x128xf32>
    tpu.vector_store %arg5[%88, %c0_40, %c0_41], %91 {strides = array<i32>} : memref<8x3x128xf32, #tpu.memory_space<vmem>>, vector<1x3x128xf32>,
    %c5_i32 = arith.constant 5 : i32
    %c1_i32_42 = arith.constant 1 : i32
    %92 = arith.muli %c5_i32, %c1_i32_42 : i32
    %c0_i32_43 = arith.constant 0 : i32
    %93 = arith.addi %c0_i32_43, %92 : i32
    %94 = arith.index_cast %93 : i32 to index
    %c0_44 = arith.constant 0 : index
    %95 = vector.load %arg2[%94, %c0_44] : memref<8x128xi32, #tpu.memory_space<vmem>>, vector<1x128xi32>
    %96 = vector.broadcast %95 : vector<1x128xi32> to vector<8x128xi32>
    %97 = arith.cmpi eq, %2, %96 : vector<8x128xi32>
    %98 = arith.select %97, %14, %16 : vector<8x128xi1>, vector<8x128xf32>
    %99 = arith.index_cast %93 : i32 to index
    %c0_45 = arith.constant 0 : index
    %c0_46 = arith.constant 0 : index
    %100 = vector.load %arg1[%99, %c0_45, %c0_46] : memref<8x3x8xf32, #tpu.memory_space<vmem>>, vector<1x3x8xf32>
    %101 = vector.shape_cast %100 : vector<1x3x8xf32> to vector<3x8xf32>
    %cst_47 = arith.constant dense<0.000000e+00> : vector<3x128xf32>
    %102 = tpu.matmul %101, %98, %cst_47 {dimension_numbers = #tpu.dot_dimension_numbers<[1], [0], [0], [1], [0, 0, 1, 1], [], []>} : vector<3x8xf32>, vector<8x128xf32>, vector<3x128xf32> -> vector<3x128xf32>
    %103 = arith.index_cast %93 : i32 to index
    %c0_48 = arith.constant 0 : index
    %c0_49 = arith.constant 0 : index
    %104 = vector.load %arg5[%103, %c0_48, %c0_49] : memref<8x3x128xf32, #tpu.memory_space<vmem>>, vector<1x3x128xf32>
    %105 = vector.shape_cast %104 : vector<1x3x128xf32> to vector<3x128xf32>
    %106 = vector.shape_cast %102 : vector<3x128xf32> to vector<1x3x128xf32>
    tpu.vector_store %arg5[%103, %c0_48, %c0_49], %106 {strides = array<i32>} : memref<8x3x128xf32, #tpu.memory_space<vmem>>, vector<1x3x128xf32>,
    %c6_i32 = arith.constant 6 : i32
    %c1_i32_50 = arith.constant 1 : i32
    %107 = arith.muli %c6_i32, %c1_i32_50 : i32
    %c0_i32_51 = arith.constant 0 : i32
    %108 = arith.addi %c0_i32_51, %107 : i32
    %109 = arith.index_cast %108 : i32 to index
    %c0_52 = arith.constant 0 : index
    %110 = vector.load %arg2[%109, %c0_52] : memref<8x128xi32, #tpu.memory_space<vmem>>, vector<1x128xi32>
    %111 = vector.broadcast %110 : vector<1x128xi32> to vector<8x128xi32>
    %112 = arith.cmpi eq, %2, %111 : vector<8x128xi32>
    %113 = arith.select %112, %14, %16 : vector<8x128xi1>, vector<8x128xf32>
    %114 = arith.index_cast %108 : i32 to index
    %c0_53 = arith.constant 0 : index
    %c0_54 = arith.constant 0 : index
    %115 = vector.load %arg1[%114, %c0_53, %c0_54] : memref<8x3x8xf32, #tpu.memory_space<vmem>>, vector<1x3x8xf32>
    %116 = vector.shape_cast %115 : vector<1x3x8xf32> to vector<3x8xf32>
    %cst_55 = arith.constant dense<0.000000e+00> : vector<3x128xf32>
    %117 = tpu.matmul %116, %113, %cst_55 {dimension_numbers = #tpu.dot_dimension_numbers<[1], [0], [0], [1], [0, 0, 1, 1], [], []>} : vector<3x8xf32>, vector<8x128xf32>, vector<3x128xf32> -> vector<3x128xf32>
    %118 = arith.index_cast %108 : i32 to index
    %c0_56 = arith.constant 0 : index
    %c0_57 = arith.constant 0 : index
    %119 = vector.load %arg5[%118, %c0_56, %c0_57] : memref<8x3x128xf32, #tpu.memory_space<vmem>>, vector<1x3x128xf32>
    %120 = vector.shape_cast %119 : vector<1x3x128xf32> to vector<3x128xf32>
    %121 = vector.shape_cast %117 : vector<3x128xf32> to vector<1x3x128xf32>
    tpu.vector_store %arg5[%118, %c0_56, %c0_57], %121 {strides = array<i32>} : memref<8x3x128xf32, #tpu.memory_space<vmem>>, vector<1x3x128xf32>,
    %c7_i32_58 = arith.constant 7 : i32
    %c1_i32_59 = arith.constant 1 : i32
    %122 = arith.muli %c7_i32_58, %c1_i32_59 : i32
    %c0_i32_60 = arith.constant 0 : i32
    %123 = arith.addi %c0_i32_60, %122 : i32
    %124 = arith.index_cast %123 : i32 to index
    %c0_61 = arith.constant 0 : index
    %125 = vector.load %arg2[%124, %c0_61] : memref<8x128xi32, #tpu.memory_space<vmem>>, vector<1x128xi32>
    %126 = vector.broadcast %125 : vector<1x128xi32> to vector<8x128xi32>
    %127 = arith.cmpi eq, %2, %126 : vector<8x128xi32>
    %128 = arith.select %127, %14, %16 : vector<8x128xi1>, vector<8x128xf32>
    %129 = arith.index_cast %123 : i32 to index
    %c0_62 = arith.constant 0 : index
    %c0_63 = arith.constant 0 : index
    %130 = vector.load %arg1[%129, %c0_62, %c0_63] : memref<8x3x8xf32, #tpu.memory_space<vmem>>, vector<1x3x8xf32>
    %131 = vector.shape_cast %130 : vector<1x3x8xf32> to vector<3x8xf32>
    %cst_64 = arith.constant dense<0.000000e+00> : vector<3x128xf32>
    %132 = tpu.matmul %131, %128, %cst_64 {dimension_numbers = #tpu.dot_dimension_numbers<[1], [0], [0], [1], [0, 0, 1, 1], [], []>} : vector<3x8xf32>, vector<8x128xf32>, vector<3x128xf32> -> vector<3x128xf32>
    %133 = arith.index_cast %123 : i32 to index
    %c0_65 = arith.constant 0 : index
    %c0_66 = arith.constant 0 : index
    %134 = vector.load %arg5[%133, %c0_65, %c0_66] : memref<8x3x128xf32, #tpu.memory_space<vmem>>, vector<1x3x128xf32>
    %135 = vector.shape_cast %134 : vector<1x3x128xf32> to vector<3x128xf32>
    %136 = vector.shape_cast %132 : vector<3x128xf32> to vector<1x3x128xf32>
    tpu.vector_store %arg5[%133, %c0_65, %c0_66], %136 {strides = array<i32>} : memref<8x3x128xf32, #tpu.memory_space<vmem>>, vector<1x3x128xf32>,
    %c8_i32 = arith.constant 8 : i32
    %c0_67 = arith.constant 0 : index
    %c0_68 = arith.constant 0 : index
    %c0_69 = arith.constant 0 : index
    %137 = vector.load %arg5[%c0_67, %c0_68, %c0_69] : memref<8x3x128xf32, #tpu.memory_space<vmem>>, vector<8x3x128xf32>
    %138 = vector.extract_strided_slice %137 {offsets = [0, 0, 0], sizes = [8, 1, 128], strides = [1, 1, 1]} : vector<8x3x128xf32> to vector<8x1x128xf32>
    %139 = vector.shape_cast %138 : vector<8x1x128xf32> to vector<8x128xf32>
    %140 = vector.extract_strided_slice %137 {offsets = [0, 1, 0], sizes = [8, 1, 128], strides = [1, 1, 1]} : vector<8x3x128xf32> to vector<8x1x128xf32>
    %141 = vector.shape_cast %140 : vector<8x1x128xf32> to vector<8x128xf32>
    %142 = vector.extract_strided_slice %137 {offsets = [0, 2, 0], sizes = [8, 1, 128], strides = [1, 1, 1]} : vector<8x3x128xf32> to vector<8x1x128xf32>
    %143 = vector.shape_cast %142 : vector<8x1x128xf32> to vector<8x128xf32>
    %144 = arith.mulf %139, %139 : vector<8x128xf32>
    %145 = arith.mulf %141, %141 : vector<8x128xf32>
    %146 = arith.addf %144, %145 : vector<8x128xf32>
    %147 = arith.mulf %143, %143 : vector<8x128xf32>
    %148 = arith.addf %146, %147 : vector<8x128xf32>
    %149 = math.sqrt %148 : vector<8x128xf32>
    %c0_70 = arith.constant 0 : index
    %c0_71 = arith.constant 0 : index
    %150 = vector.load %arg3[%c0_70, %c0_71] : memref<8x128xi32, #tpu.memory_space<vmem>>, vector<8x128xi32>
    %c0_i32_72 = arith.constant 0 : i32
    %151 = vector.broadcast %c0_i32_72 : i32 to vector<8x128xi32>
    %152 = arith.cmpi ne, %150, %151 : vector<8x128xi32>
    %cst_73 = arith.constant 0.000000e+00 : f32
    %153 = vector.broadcast %cst_73 : f32 to vector<8x128xf32>
    %154 = arith.select %152, %149, %153 : vector<8x128xi1>, vector<8x128xf32>
    %c0_74 = arith.constant 0 : index
    %c0_75 = arith.constant 0 : index
    %155 = vector.load %arg4[%c0_74, %c0_75] : memref<8x128xf32, #tpu.memory_space<vmem>>, vector<8x128xf32>
    tpu.vector_store %arg4[%c0_74, %c0_75], %154 {strides = array<i32>} : memref<8x128xf32, #tpu.memory_space<vmem>>, vector<8x128xf32>,
    %cst_76 = arith.constant 9.99999993E-9 : f32
    %156 = vector.broadcast %cst_76 : f32 to vector<8x128xf32>
    %157 = arith.addf %154, %156 : vector<8x128xf32>
    %cst_77 = arith.constant 1.000000e+00 : f32
    %158 = vector.broadcast %cst_77 : f32 to vector<8x128xf32>
    %159 = arith.select %152, %157, %158 : vector<8x128xi1>, vector<8x128xf32>
    %160 = tpu.reciprocal %159 : vector<8x128xf32> -> vector<8x128xf32>
    %161 = vector.shape_cast %160 : vector<8x128xf32> to vector<8x1x128xf32>
    %162 = vector.broadcast %161 : vector<8x1x128xf32> to vector<8x3x128xf32>
    %163 = arith.mulf %137, %162 : vector<8x3x128xf32>
    %c0_78 = arith.constant 0 : index
    %c0_79 = arith.constant 0 : index
    %c0_80 = arith.constant 0 : index
    %164 = vector.load %arg5[%c0_78, %c0_79, %c0_80] : memref<8x3x128xf32, #tpu.memory_space<vmem>>, vector<8x3x128xf32>
    tpu.vector_store %arg5[%c0_78, %c0_79, %c0_80], %163 {strides = array<i32>} : memref<8x3x128xf32, #tpu.memory_space<vmem>>, vector<8x3x128xf32>,
    return
  }
  func.func @transform_0(%arg0: i32) -> (i32, i32, i32) {
    %c0_i32 = arith.constant 0 : i32
    %c0_i32_0 = arith.constant 0 : i32
    %c0_i32_1 = arith.constant 0 : i32
    return %arg0, %c0_i32, %c0_i32_0 : i32, i32, i32
  }
  func.func @transform_1(%arg0: i32) -> (i32, i32) {
    %c0_i32 = arith.constant 0 : i32
    %c0_i32_0 = arith.constant 0 : i32
    return %arg0, %c0_i32 : i32, i32
  }
  func.func @transform_2(%arg0: i32) -> (i32, i32) {
    %c0_i32 = arith.constant 0 : i32
    %c0_i32_0 = arith.constant 0 : i32
    return %arg0, %c0_i32 : i32, i32
  }
  func.func @transform_3(%arg0: i32) -> (i32, i32) {
    %c0_i32 = arith.constant 0 : i32
    %c0_i32_0 = arith.constant 0 : i32
    return %arg0, %c0_i32 : i32, i32
  }
  func.func @transform_4(%arg0: i32) -> (i32, i32, i32) {
    %c0_i32 = arith.constant 0 : i32
    %c0_i32_0 = arith.constant 0 : i32
    %c0_i32_1 = arith.constant 0 : i32
    return %arg0, %c0_i32, %c0_i32_0 : i32, i32, i32
  }
}

</mosaic_0001>

<llo_original>
// kernel: tpu_custom_call.1
$region0: #{tpu_custom_call.1}
  #allocation0 [shape = 'u32[]', space=smem, size = 0x4, offset = 0x4, fixed_abs, tag = 'smem constant byte address 0x4 - core index']
  #allocation1 [shape = 'u32[144,128]{1,0:T(1,128)}', space=vmem, size = 0x12000, scoped, tag = 'internal scratch']
  %s0 = inlined_call_operand.hbm [shape: f32[16,3,8], index: 0, kind: input, shape index: {}]
  %s1 = inlined_call_operand.hbm [shape: s32[16,128], index: 1, kind: input, shape index: {}]
  %s2 = inlined_call_operand.hbm [shape: s32[16,128], index: 2, kind: input, shape index: {}]
  %s3 = inlined_call_operand.hbm [shape: f32[16,128], index: 3, kind: output, shape index: {0}]
  %s4 = inlined_call_operand.hbm [shape: f32[16,3,128], index: 4, kind: output, shape index: {1}]
  %5 = xla_tuple %s3, %s4
  %s6 = sld [smem:[#allocation0]]
  $region65: #{tpu_custom_call.1} parent=0
    _
  %s8 = ssub.s32 1, %s6
  %s9 = scalar_select 0, %s8, %s6
  $region1: #{tpu_custom_call.1} parent=0
    #allocation2 [shape = 'u8[32768]{0}', space=vmem, size = 0x8000, scoped, tag = 'input window, operand 0']
    #allocation3 [shape = 's32[2]{0}', space=sflag, size = 0x8, scoped, tag = 'scoped memory for tpu_custom_call.1']
    #allocation4 [shape = 's32[2]{0}', space=sflag, size = 0x8, scoped, tag = 'scoped memory for tpu_custom_call.1']
    #allocation5 [shape = 'u8[8192]{0}', space=vmem, size = 0x2000, scoped, tag = 'input window, operand 1']
    #allocation6 [shape = 's32[2]{0}', space=sflag, size = 0x8, scoped, tag = 'scoped memory for tpu_custom_call.1']
    #allocation7 [shape = 'u8[8192]{0}', space=vmem, size = 0x2000, scoped, tag = 'input window, operand 2']
    #allocation8 [shape = 'u8[8192]{0}', space=vmem, size = 0x2000, scoped, tag = 'output window, operand 0']
    #allocation9 [shape = 'u8[32768]{0}', space=vmem, size = 0x8000, scoped, tag = 'output window, operand 1']
    #allocation10 [shape = 's32[2]{0}', space=sflag, size = 0x8, scoped, tag = 'scoped memory for tpu_custom_call.1']
    %10 = vsyncpa [#allocation3], 0
    %s11 = scalar_lea.sflag [#allocation3], 1
    %12 = vsyncpa %s11, 0
    %13 = vsyncpa [#allocation6], 0
    %s14 = scalar_lea.sflag [#allocation6], 1
    %15 = vsyncpa %s14, 0
    %16 = vsyncpa [#allocation4], 0
    %s17 = scalar_lea.sflag [#allocation4], 1
    %18 = vsyncpa %s17, 0
    %19 = vsyncpa [#allocation10], 0
    %s20 = scalar_lea.sflag [#allocation10], 1
    %21 = vsyncpa %s20, 0
    loop: start=0, step=1, limit=4
    $region2: #{tpu_custom_call.1} parent=1 // loop_pre_header
      _
    $region3: #{tpu_custom_call.1} parent=1 // loop_header
      %s23 = sphi 0, %s27
      %p24 = scmp.ge.s32.totalorder %s23, 4
      %s33 = sphi 0, %s35
      %s36 = sphi 0, %s33
      %s37 = sphi 0, %s36
      %s53 = sphi 0, %s37
      %s59 = sphi 0, %s61
      %s62 = sphi 0, %s59
      %s63 = sphi 0, %s62
      %s79 = sphi 0, %s63
      %s85 = sphi 0, %s87
      %s88 = sphi 0, %s85
      %s89 = sphi 0, %s88
      %s105 = sphi 0, %s89
      %s111 = sphi 0, %s113
      %s114 = sphi 0, %s111
      %s115 = sphi 0, %s114
      %s131 = sphi 0, %s115
      %s137 = sphi 0, %s139
      %s140 = sphi 0, %s137
      %s141 = sphi 0, %s140
      %s157 = sphi 0, %s141
    $region4: #{tpu_custom_call.1} parent=1 // loop_header_branch
      %26 = sbr.rel (%p24) target = $region8
    $region5: #{tpu_custom_call.1} parent=1 // loop_body
      %s28 = ssub.s32 %s23, 1
      %s29 = ssub.s32 %s23, 2
      %s30 = sadd.s32 %s23, 1
      %s31 = ssub.s32 %s23, %s30
      %p32 = scmp.eq.s32.totalorder %s31, 0
      %s34 = sadd.s32 %s33, 1
      %s35 = scalar_select %p32, %s33, %s34
      %p38 = pneg %p32
      %p39 = scmp.eq.s32.totalorder %s23, 1
      %p40 = por %p38, %p39
      %p41 = scmp.ne.s32.totalorder %s33, %s36
      %p42 = scmp.eq.s32.totalorder %s23, 0
      %p43 = por %p41, %p42
      %p44 = scmp.ne.s32.totalorder %s33, %s36
      %p45 = scmp.eq.s32.totalorder %s28, 1
      %p46 = por %p44, %p45
      %p47 = scmp.ne.s32.totalorder %s36, %s37
      %p48 = scmp.eq.s32.totalorder %s28, 0
      %p49 = por %p47, %p48
      %p50 = scmp.ne.s32.totalorder %s36, %s37
      %p51 = scmp.eq.s32.totalorder %s29, 1
      %p52 = por %p50, %p51
      %p54 = scmp.ne.s32.totalorder %s37, %s53
      %p55 = scmp.eq.s32.totalorder %s29, 0
      %p56 = por %p54, %p55
      %s57 = ssub.s32 %s23, %s30
      %p58 = scmp.eq.s32.totalorder %s57, 0
      %s60 = sadd.s32 %s59, 1
      %s61 = scalar_select %p58, %s59, %s60
      %p64 = pneg %p58
      %p65 = scmp.eq.s32.totalorder %s23, 1
      %p66 = por %p64, %p65
      %p67 = scmp.ne.s32.totalorder %s59, %s62
      %p68 = scmp.eq.s32.totalorder %s23, 0
      %p69 = por %p67, %p68
      %p70 = scmp.ne.s32.totalorder %s59, %s62
      %p71 = scmp.eq.s32.totalorder %s28, 1
      %p72 = por %p70, %p71
      %p73 = scmp.ne.s32.totalorder %s62, %s63
      %p74 = scmp.eq.s32.totalorder %s28, 0
      %p75 = por %p73, %p74
      %p76 = scmp.ne.s32.totalorder %s62, %s63
      %p77 = scmp.eq.s32.totalorder %s29, 1
      %p78 = por %p76, %p77
      %p80 = scmp.ne.s32.totalorder %s63, %s79
      %p81 = scmp.eq.s32.totalorder %s29, 0
      %p82 = por %p80, %p81
      %s83 = ssub.s32 %s23, %s30
      %p84 = scmp.eq.s32.totalorder %s83, 0
      %s86 = sadd.s32 %s85, 1
      %s87 = scalar_select %p84, %s85, %s86
      %p90 = pneg %p84
      %p91 = scmp.eq.s32.totalorder %s23, 1
      %p92 = por %p90, %p91
      %p93 = scmp.ne.s32.totalorder %s85, %s88
      %p94 = scmp.eq.s32.totalorder %s23, 0
      %p95 = por %p93, %p94
      %p96 = scmp.ne.s32.totalorder %s85, %s88
      %p97 = scmp.eq.s32.totalorder %s28, 1
      %p98 = por %p96, %p97
      %p99 = scmp.ne.s32.totalorder %s88, %s89
      %p100 = scmp.eq.s32.totalorder %s28, 0
      %p101 = por %p99, %p100
      %p102 = scmp.ne.s32.totalorder %s88, %s89
      %p103 = scmp.eq.s32.totalorder %s29, 1
      %p104 = por %p102, %p103
      %p106 = scmp.ne.s32.totalorder %s89, %s105
      %p107 = scmp.eq.s32.totalorder %s29, 0
      %p108 = por %p106, %p107
      %s109 = ssub.s32 %s23, %s30
      %p110 = scmp.eq.s32.totalorder %s109, 0
      %s112 = sadd.s32 %s111, 1
      %s113 = scalar_select %p110, %s111, %s112
      %p116 = pneg %p110
      %p117 = scmp.eq.s32.totalorder %s23, 1
      %p118 = por %p116, %p117
      %p119 = scmp.ne.s32.totalorder %s111, %s114
      %p120 = scmp.eq.s32.totalorder %s23, 0
      %p121 = por %p119, %p120
      %p122 = scmp.ne.s32.totalorder %s111, %s114
      %p123 = scmp.eq.s32.totalorder %s28, 1
      %p124 = por %p122, %p123
      %p125 = scmp.ne.s32.totalorder %s114, %s115
      %p126 = scmp.eq.s32.totalorder %s28, 0
      %p127 = por %p125, %p126
      %p128 = scmp.ne.s32.totalorder %s114, %s115
      %p129 = scmp.eq.s32.totalorder %s29, 1
      %p130 = por %p128, %p129
      %p132 = scmp.ne.s32.totalorder %s115, %s131
      %p133 = scmp.eq.s32.totalorder %s29, 0
      %p134 = por %p132, %p133
      %s135 = ssub.s32 %s23, %s30
      %p136 = scmp.eq.s32.totalorder %s135, 0
      %s138 = sadd.s32 %s137, 1
      %s139 = scalar_select %p136, %s137, %s138
      %p142 = pneg %p136
      %p143 = scmp.eq.s32.totalorder %s23, 1
      %p144 = por %p142, %p143
      %p145 = scmp.ne.s32.totalorder %s137, %s140
      %p146 = scmp.eq.s32.totalorder %s23, 0
      %p147 = por %p145, %p146
      %p148 = scmp.ne.s32.totalorder %s137, %s140
      %p149 = scmp.eq.s32.totalorder %s28, 1
      %p150 = por %p148, %p149
      %p151 = scmp.ne.s32.totalorder %s140, %s141
      %p152 = scmp.eq.s32.totalorder %s28, 0
      %p153 = por %p151, %p152
      %p154 = scmp.ne.s32.totalorder %s140, %s141
      %p155 = scmp.eq.s32.totalorder %s29, 1
      %p156 = por %p154, %p155
      %p158 = scmp.ne.s32.totalorder %s141, %s157
      %p159 = scmp.eq.s32.totalorder %s29, 0
      %p160 = por %p158, %p159
      %p161 = scmp.le.s32.totalorder 1, %s23
      %p162 = scmp.lt.s32.totalorder %s23, 3
      %p163 = pnand %p161, %p162
      %p164 = pneg %p163
      // Predicated region
      $region9: #{tpu_custom_call.1} parent=5 // pred_check
        _
      $region10: #{tpu_custom_call.1} parent=5 // pred_check_branch
        %166 = sbr.rel (%p163) target = $region12
      $region11: #{tpu_custom_call.1} parent=5 // pred_region
        %s167 = ssub.s32 %s23, 1
      $region12: #{tpu_custom_call.1} parent=5 // pred_fallthru
        _
      %p168 = scmp.lt.s32.totalorder %s23, 2
      // Predicated region
      $region13: #{tpu_custom_call.1} parent=5 // pred_check
        %p169 = pneg %p168
      $region14: #{tpu_custom_call.1} parent=5 // pred_check_branch
        %171 = sbr.rel (%p169) target = $region16
      $region15: #{tpu_custom_call.1} parent=5 // pred_region
        // Predicated region
        $region17: #{tpu_custom_call.1} parent=15 // pred_check
          %p172 = pneg %p43
        $region18: #{tpu_custom_call.1} parent=15 // pred_check_branch
          %174 = sbr.rel (%p172) target = $region20
        $region19: #{tpu_custom_call.1} parent=15 // pred_region
          %s175 = sand.u32 %s33, 1
          %s176 = scalar_lea.sflag [#allocation3], %s175
          %s177 = sand.u32 %s33, 1
          %s178 = smul.addr %s177, 32
          %s179 = scalar_lea.vmem [#allocation2], %s178
          %s180 = smul.u32 8, %s23
          %s182 = ssub.s32 512, 512
          %183 = vsyncadd %s176, %s182
          %s184 = smul.addr %s180, 64
          %s185 = scalar_lea.hbm %s0, %s184
          %s186 = sshll.u32 %s179, 4
          %s187 = int_to_ptr.vmem [resolvable:$true] %s186
          %192 = dma.hbm_to_vmem [thread:$0]  %s185, 512, %s187, %s176, 64, 64, 4
        $region20: #{tpu_custom_call.1} parent=15 // pred_fallthru
          _
        // Predicated region
        $region21: #{tpu_custom_call.1} parent=15 // pred_check
          %p193 = pneg %p69
        $region22: #{tpu_custom_call.1} parent=15 // pred_check_branch
          %195 = sbr.rel (%p193) target = $region24
        $region23: #{tpu_custom_call.1} parent=15 // pred_region
          %s196 = sand.u32 %s23, 1
          %s197 = scalar_lea.sflag [#allocation6], %s196
          %s198 = sand.u32 %s59, 1
          %s199 = smul.addr %s198, 8
          %s200 = scalar_lea.vmem [#allocation5], %s199
          %s202 = ssub.s32 128, 128
          %203 = vsyncadd %s197, %s202
          %s204 = smul.addr %s23, 128
          %s205 = scalar_lea.hbm %s1, %s204
          %s207 = sshll.u32 %s200, 4
          %s208 = int_to_ptr.vmem [resolvable:$true] %s207
          %210 = dma.hbm_to_vmem [thread:$0]  %s205, 128, %s208, %s197
        $region24: #{tpu_custom_call.1} parent=15 // pred_fallthru
          _
        // Predicated region
        $region25: #{tpu_custom_call.1} parent=15 // pred_check
          %p211 = pneg %p95
        $region26: #{tpu_custom_call.1} parent=15 // pred_check_branch
          %213 = sbr.rel (%p211) target = $region28
        $region27: #{tpu_custom_call.1} parent=15 // pred_region
          %s214 = sand.u32 %s23, 1
          %s215 = scalar_lea.sflag [#allocation6], %s214
          %s216 = sand.u32 %s85, 1
          %s217 = smul.addr %s216, 8
          %s218 = scalar_lea.vmem [#allocation7], %s217
          %s220 = ssub.s32 128, 128
          %221 = vsyncadd %s215, %s220
          %s222 = smul.addr %s23, 128
          %s223 = scalar_lea.hbm %s2, %s222
          %s225 = sshll.u32 %s218, 4
          %s226 = int_to_ptr.vmem [resolvable:$true] %s225
          %228 = dma.hbm_to_vmem [thread:$0]  %s223, 128, %s226, %s215
        $region28: #{tpu_custom_call.1} parent=15 // pred_fallthru
          _
      $region16: #{tpu_custom_call.1} parent=5 // pred_fallthru
        _
      %p229 = scmp.le.s32.totalorder 1, %s23
      %p230 = scmp.lt.s32.totalorder %s23, 3
      %p231 = pnand %p229, %p230
      %p232 = pneg %p231
      // Predicated region
      $region29: #{tpu_custom_call.1} parent=5 // pred_check
        _
      $region30: #{tpu_custom_call.1} parent=5 // pred_check_branch
        %234 = sbr.rel (%p231) target = $region32
      $region31: #{tpu_custom_call.1} parent=5 // pred_region
        %s235 = ssub.s32 %s23, 1
        %s236 = sand.u32 %s36, 1
        %s237 = scalar_lea.sflag [#allocation3], %s236
        %s238 = sand.u32 %s36, 1
        %s239 = smul.addr %s238, 32
        %s240 = scalar_lea.vmem [#allocation2], %s239
        // Predicated region
        $region33: #{tpu_custom_call.1} parent=31 // pred_check
          %p241 = pneg %p49
        $region34: #{tpu_custom_call.1} parent=31 // pred_check_branch
          %243 = sbr.rel (%p241) target = $region36
        $region35: #{tpu_custom_call.1} parent=31 // pred_region
          %244 = dma.done %s237, 512
        $region36: #{tpu_custom_call.1} parent=31 // pred_fallthru
          _
        %s245 = sand.u32 %s28, 1
        %s246 = scalar_lea.sflag [#allocation6], %s245
        %s247 = sand.u32 %s62, 1
        %s248 = smul.addr %s247, 8
        %s249 = scalar_lea.vmem [#allocation5], %s248
        // Predicated region
        $region37: #{tpu_custom_call.1} parent=31 // pred_check
          %p250 = pneg %p75
        $region38: #{tpu_custom_call.1} parent=31 // pred_check_branch
          %252 = sbr.rel (%p250) target = $region40
        $region39: #{tpu_custom_call.1} parent=31 // pred_region
          %253 = dma.done %s246, 128
        $region40: #{tpu_custom_call.1} parent=31 // pred_fallthru
          _
        %s254 = sand.u32 %s28, 1
        %s255 = scalar_lea.sflag [#allocation6], %s254
        %s256 = sand.u32 %s88, 1
        %s257 = smul.addr %s256, 8
        %s258 = scalar_lea.vmem [#allocation7], %s257
        // Predicated region
        $region41: #{tpu_custom_call.1} parent=31 // pred_check
          %p259 = pneg %p101
        $region42: #{tpu_custom_call.1} parent=31 // pred_check_branch
          %261 = sbr.rel (%p259) target = $region44
        $region43: #{tpu_custom_call.1} parent=31 // pred_region
          %262 = dma.done %s255, 128
        $region44: #{tpu_custom_call.1} parent=31 // pred_fallthru
          _
        %s263 = sand.u32 %s36, 1
        %s264 = scalar_lea.sflag [#allocation3], %s263
        %s265 = sand.u32 %s36, 1
        %s266 = smul.addr %s265, 32
        %s267 = scalar_lea.vmem [#allocation2], %s266
        %p268 = pneg %p49
        %p269 = pneg %p46
        %s270 = sand.u32 %s28, 1
        %s271 = scalar_lea.sflag [#allocation6], %s270
        %s272 = sand.u32 %s62, 1
        %s273 = smul.addr %s272, 8
        %s274 = scalar_lea.vmem [#allocation5], %s273
        %p275 = pneg %p75
        %p276 = pneg %p72
        %s277 = sand.u32 %s28, 1
        %s278 = scalar_lea.sflag [#allocation6], %s277
        %s279 = sand.u32 %s88, 1
        %s280 = smul.addr %s279, 8
        %s281 = scalar_lea.vmem [#allocation7], %s280
        %p282 = pneg %p101
        %p283 = pneg %p98
        %p284 = pneg %p127
        %p285 = pneg %p124
        %s286 = sand.u32 %s114, 1
        %s287 = scalar_lea.sflag [#allocation4], %s286
        %s288 = sand.u32 %s114, 1
        %s289 = smul.addr %s288, 8
        %s290 = scalar_lea.vmem [#allocation8], %s289
        %p291 = pneg %p153
        %p292 = pneg %p150
        %s293 = sand.u32 %s140, 1
        %s294 = scalar_lea.sflag [#allocation10], %s293
        %s295 = sand.u32 %s140, 1
        %s296 = smul.addr %s295, 32
        %s297 = scalar_lea.vmem [#allocation9], %s296
        %s298 = smul.u32 8, %s28
        %s299 = smul.u32 8, %s28
        %v300 = vlaneseq
        %v301 = vshrl.u32 %v300, 7
        %v302 = vlaneseq
        %v303 = vand.u32 %v302, 127
        %v304 = vmul.u32 %v301, 7
        %vm305 = vcmp.ge.s32.totalorder %v303, %v304
        %v306 = vadd.s32 %v304, 7
        %vm307 = vcmp.lt.s32.totalorder %v303, %v306
        %vm308 = vmand %vm305, %vm307
        %v309 = vsel %vm308, 1, 0
        %v310 = vcvt.s32.f32 %v309
        %v311 = vsub.f32 1.0, %v310
        %v312 = vsub.f32 0.0, %v310
        %v313 = vld [vmem:[%s249] sm:$0x1]
        %v314 = vlaneseq
        %v315 = vshrl.u32 %v314, 7
        %v316 = vsub.s32 0, %v315
        %v317 = vrot.slane %v313, %v316
        %vm318 = vcmp.eq.s32.totalorder %v301, %v317
        %v319 = vsel %vm318, %v311, %v312
        %v320 = vld [vmem:[%s240] sm:$0x7]
        %vm321 = vcmask 64512
        %v323 = vsel %vm321, %v320, 0
        %325 = vmatprep.subr.mxu0 0.0
        %326 = vmatpush1.msra.mxu0 %v319
        %327 = vmatprep.subr.mxu0 0.0
        %328 = vmatpush1.msra.mxu0 0.0
        %329 = vmatprep.subr.mxu0 0.0
        %330 = vmatpush1.msra.mxu0 0.0
        %331 = vmatprep.subr.mxu0 0.0
        %332 = vmatpush1.msra.mxu0 0.0
        %333 = vmatprep.subr.mxu0 0.0
        %334 = vmatpush1.msra.mxu0 0.0
        %335 = vmatprep.subr.mxu0 0.0
        %336 = vmatpush1.msra.mxu0 0.0
        %337 = vmatprep.subr.mxu0 0.0
        %338 = vmatpush1.msra.mxu0 0.0
        %339 = vmatprep.subr.mxu0 0.0
        %340 = vmatpush1.msra.mxu0 0.0
        %341 = vmatprep.subr.mxu0 0.0
        %342 = vmatpush1.msra.mxu0 0.0
        %343 = vmatprep.subr.mxu0 0.0
        %344 = vmatpush1.msra.mxu0 0.0
        %345 = vmatprep.subr.mxu0 0.0
        %346 = vmatpush1.msra.mxu0 0.0
        %347 = vmatprep.subr.mxu0 0.0
        %348 = vmatpush1.msra.mxu0 0.0
        %349 = vmatprep.subr.mxu0 0.0
        %350 = vmatpush1.msra.mxu0 0.0
        %351 = vmatprep.subr.mxu0 0.0
        %352 = vmatpush1.msra.mxu0 0.0
        %353 = vmatprep.subr.mxu0 0.0
        %354 = vmatpush1.msra.mxu0 0.0
        %355 = vmatprep.subr.mxu0 0.0
        %356 = vmatpush1.msra.mxu0 0.0
        %357 = vmatprep.subr.mxu0 0.0
        %358 = vmatpush1.msra.mxu0 0.0
        %359 = vmatprep.subr.mxu0 0.0
        %360 = vmatpush1.msra.mxu0 0.0
        %361 = vmatprep.subr.mxu0 0.0
        %362 = vmatpush1.msra.mxu0 0.0
        %363 = vmatprep.subr.mxu0 0.0
        %364 = vmatpush1.msra.mxu0 0.0
        %365 = vmatprep.subr.mxu0 0.0
        %366 = vmatpush1.msra.mxu0 0.0
        %367 = vmatprep.subr.mxu0 0.0
        %368 = vmatpush1.msra.mxu0 0.0
        %369 = vmatprep.subr.mxu0 0.0
        %370 = vmatpush1.msra.mxu0 0.0
        %371 = vmatprep.subr.mxu0 0.0
        %372 = vmatpush1.msra.mxu0 0.0
        %373 = vmatprep.subr.mxu0 0.0
        %374 = vmatpush1.msra.mxu0 0.0
        %375 = vmatprep.subr.mxu0 0.0
        %376 = vmatpush1.msra.mxu0 0.0
        %377 = vmatprep.subr.mxu0 0.0
        %378 = vmatpush1.msra.mxu0 0.0
        %379 = vmatprep.subr.mxu0 0.0
        %380 = vmatpush1.msra.mxu0 0.0
        %381 = vmatprep.subr.mxu0 0.0
        %382 = vmatpush1.msra.mxu0 0.0
        %383 = vmatprep.subr.mxu0 0.0
        %384 = vmatpush1.msra.mxu0 0.0
        %385 = vmatprep.subr.mxu0 0.0
        %386 = vmatpush1.msra.mxu0 0.0
        %387 = vmatprep.subr.mxu0 0.0
        %388 = vmatpush1.msra.mxu0 0.0
        %389 = vmatprep.mubr.f32.mxu0 0.0
        %390 = vmatmul.mubr.f32.gmra.mrb[0].mxu0 %v323
        %v391 = vpop.f32.mrb[0].mxu0
        %v392 = vadd.f32 0.0, %v391
        %v393 = vpop.f32.mrb[0].mxu0
        %394 = vdwg.mxu0
        %395 = vst [vmem:[%s297] sm:$0x7] %v392
        %v396 = vld [vmem:[%s249 + $0x1] sm:$0x1]
        %v397 = vlaneseq
        %v398 = vshrl.u32 %v397, 7
        %v399 = vsub.s32 0, %v398
        %v400 = vrot.slane %v396, %v399
        %vm401 = vcmp.eq.s32.totalorder %v301, %v400
        %v402 = vsel %vm401, %v311, %v312
        %s403 = scalar_lea.vmem %s240, 4 [#allocation2]
        %v404 = vld [vmem:[%s403] sm:$0x7]
        %v406 = vsel %vm321, %v404, 0
        %408 = vmatprep.subr.mxu0 0.0
        %409 = vmatpush1.msra.mxu0 %v402
        %410 = vmatprep.subr.mxu0 0.0
        %411 = vmatpush1.msra.mxu0 0.0
        %412 = vmatprep.subr.mxu0 0.0
        %413 = vmatpush1.msra.mxu0 0.0
        %414 = vmatprep.subr.mxu0 0.0
        %415 = vmatpush1.msra.mxu0 0.0
        %416 = vmatprep.subr.mxu0 0.0
        %417 = vmatpush1.msra.mxu0 0.0
        %418 = vmatprep.subr.mxu0 0.0
        %419 = vmatpush1.msra.mxu0 0.0
        %420 = vmatprep.subr.mxu0 0.0
        %421 = vmatpush1.msra.mxu0 0.0
        %422 = vmatprep.subr.mxu0 0.0
        %423 = vmatpush1.msra.mxu0 0.0
        %424 = vmatprep.subr.mxu0 0.0
        %425 = vmatpush1.msra.mxu0 0.0
        %426 = vmatprep.subr.mxu0 0.0
        %427 = vmatpush1.msra.mxu0 0.0
        %428 = vmatprep.subr.mxu0 0.0
        %429 = vmatpush1.msra.mxu0 0.0
        %430 = vmatprep.subr.mxu0 0.0
        %431 = vmatpush1.msra.mxu0 0.0
        %432 = vmatprep.subr.mxu0 0.0
        %433 = vmatpush1.msra.mxu0 0.0
        %434 = vmatprep.subr.mxu0 0.0
        %435 = vmatpush1.msra.mxu0 0.0
        %436 = vmatprep.subr.mxu0 0.0
        %437 = vmatpush1.msra.mxu0 0.0
        %438 = vmatprep.subr.mxu0 0.0
        %439 = vmatpush1.msra.mxu0 0.0
        %440 = vmatprep.subr.mxu0 0.0
        %441 = vmatpush1.msra.mxu0 0.0
        %442 = vmatprep.subr.mxu0 0.0
        %443 = vmatpush1.msra.mxu0 0.0
        %444 = vmatprep.subr.mxu0 0.0
        %445 = vmatpush1.msra.mxu0 0.0
        %446 = vmatprep.subr.mxu0 0.0
        %447 = vmatpush1.msra.mxu0 0.0
        %448 = vmatprep.subr.mxu0 0.0
        %449 = vmatpush1.msra.mxu0 0.0
        %450 = vmatprep.subr.mxu0 0.0
        %451 = vmatpush1.msra.mxu0 0.0
        %452 = vmatprep.subr.mxu0 0.0
        %453 = vmatpush1.msra.mxu0 0.0
        %454 = vmatprep.subr.mxu0 0.0
        %455 = vmatpush1.msra.mxu0 0.0
        %456 = vmatprep.subr.mxu0 0.0
        %457 = vmatpush1.msra.mxu0 0.0
        %458 = vmatprep.subr.mxu0 0.0
        %459 = vmatpush1.msra.mxu0 0.0
        %460 = vmatprep.subr.mxu0 0.0
        %461 = vmatpush1.msra.mxu0 0.0
        %462 = vmatprep.subr.mxu0 0.0
        %463 = vmatpush1.msra.mxu0 0.0
        %464 = vmatprep.subr.mxu0 0.0
        %465 = vmatpush1.msra.mxu0 0.0
        %466 = vmatprep.subr.mxu0 0.0
        %467 = vmatpush1.msra.mxu0 0.0
        %468 = vmatprep.subr.mxu0 0.0
        %469 = vmatpush1.msra.mxu0 0.0
        %470 = vmatprep.subr.mxu0 0.0
        %471 = vmatpush1.msra.mxu0 0.0
        %472 = vmatprep.mubr.f32.mxu0 0.0
        %473 = vmatmul.mubr.f32.gmra.mrb[0].mxu0 %v406
        %v474 = vpop.f32.mrb[0].mxu0
        %v475 = vadd.f32 0.0, %v474
        %v476 = vpop.f32.mrb[0].mxu0
        %477 = vdwg.mxu0
        %s478 = scalar_lea.vmem %s297, 4 [#allocation9]
        %479 = vst [vmem:[%s478] sm:$0x7] %v475
        %v480 = vld [vmem:[%s249 + $0x2] sm:$0x1]
        %v481 = vlaneseq
        %v482 = vshrl.u32 %v481, 7
        %v483 = vsub.s32 0, %v482
        %v484 = vrot.slane %v480, %v483
        %vm485 = vcmp.eq.s32.totalorder %v301, %v484
        %v486 = vsel %vm485, %v311, %v312
        %s487 = scalar_lea.vmem %s240, 8 [#allocation2]
        %v488 = vld [vmem:[%s487] sm:$0x7]
        %v490 = vsel %vm321, %v488, 0
        %492 = vmatprep.subr.mxu0 0.0
        %493 = vmatpush1.msra.mxu0 %v486
        %494 = vmatprep.subr.mxu0 0.0
        %495 = vmatpush1.msra.mxu0 0.0
        %496 = vmatprep.subr.mxu0 0.0
        %497 = vmatpush1.msra.mxu0 0.0
        %498 = vmatprep.subr.mxu0 0.0
        %499 = vmatpush1.msra.mxu0 0.0
        %500 = vmatprep.subr.mxu0 0.0
        %501 = vmatpush1.msra.mxu0 0.0
        %502 = vmatprep.subr.mxu0 0.0
        %503 = vmatpush1.msra.mxu0 0.0
        %504 = vmatprep.subr.mxu0 0.0
        %505 = vmatpush1.msra.mxu0 0.0
        %506 = vmatprep.subr.mxu0 0.0
        %507 = vmatpush1.msra.mxu0 0.0
        %508 = vmatprep.subr.mxu0 0.0
        %509 = vmatpush1.msra.mxu0 0.0
        %510 = vmatprep.subr.mxu0 0.0
        %511 = vmatpush1.msra.mxu0 0.0
        %512 = vmatprep.subr.mxu0 0.0
        %513 = vmatpush1.msra.mxu0 0.0
        %514 = vmatprep.subr.mxu0 0.0
        %515 = vmatpush1.msra.mxu0 0.0
        %516 = vmatprep.subr.mxu0 0.0
        %517 = vmatpush1.msra.mxu0 0.0
        %518 = vmatprep.subr.mxu0 0.0
        %519 = vmatpush1.msra.mxu0 0.0
        %520 = vmatprep.subr.mxu0 0.0
        %521 = vmatpush1.msra.mxu0 0.0
        %522 = vmatprep.subr.mxu0 0.0
        %523 = vmatpush1.msra.mxu0 0.0
        %524 = vmatprep.subr.mxu0 0.0
        %525 = vmatpush1.msra.mxu0 0.0
        %526 = vmatprep.subr.mxu0 0.0
        %527 = vmatpush1.msra.mxu0 0.0
        %528 = vmatprep.subr.mxu0 0.0
        %529 = vmatpush1.msra.mxu0 0.0
        %530 = vmatprep.subr.mxu0 0.0
        %531 = vmatpush1.msra.mxu0 0.0
        %532 = vmatprep.subr.mxu0 0.0
        %533 = vmatpush1.msra.mxu0 0.0
        %534 = vmatprep.subr.mxu0 0.0
        %535 = vmatpush1.msra.mxu0 0.0
        %536 = vmatprep.subr.mxu0 0.0
        %537 = vmatpush1.msra.mxu0 0.0
        %538 = vmatprep.subr.mxu0 0.0
        %539 = vmatpush1.msra.mxu0 0.0
        %540 = vmatprep.subr.mxu0 0.0
        %541 = vmatpush1.msra.mxu0 0.0
        %542 = vmatprep.subr.mxu0 0.0
        %543 = vmatpush1.msra.mxu0 0.0
        %544 = vmatprep.subr.mxu0 0.0
        %545 = vmatpush1.msra.mxu0 0.0
        %546 = vmatprep.subr.mxu0 0.0
        %547 = vmatpush1.msra.mxu0 0.0
        %548 = vmatprep.subr.mxu0 0.0
        %549 = vmatpush1.msra.mxu0 0.0
        %550 = vmatprep.subr.mxu0 0.0
        %551 = vmatpush1.msra.mxu0 0.0
        %552 = vmatprep.subr.mxu0 0.0
        %553 = vmatpush1.msra.mxu0 0.0
        %554 = vmatprep.subr.mxu0 0.0
        %555 = vmatpush1.msra.mxu0 0.0
        %556 = vmatprep.mubr.f32.mxu0 0.0
        %557 = vmatmul.mubr.f32.gmra.mrb[0].mxu0 %v490
        %v558 = vpop.f32.mrb[0].mxu0
        %v559 = vadd.f32 0.0, %v558
        %v560 = vpop.f32.mrb[0].mxu0
        %561 = vdwg.mxu0
        %s562 = scalar_lea.vmem %s297, 8 [#allocation9]
        %563 = vst [vmem:[%s562] sm:$0x7] %v559
        %v564 = vld [vmem:[%s249 + $0x3] sm:$0x1]
        %v565 = vlaneseq
        %v566 = vshrl.u32 %v565, 7
        %v567 = vsub.s32 0, %v566
        %v568 = vrot.slane %v564, %v567
        %vm569 = vcmp.eq.s32.totalorder %v301, %v568
        %v570 = vsel %vm569, %v311, %v312
        %s571 = scalar_lea.vmem %s240, 12 [#allocation2]
        %v572 = vld [vmem:[%s571] sm:$0x7]
        %v574 = vsel %vm321, %v572, 0
        %576 = vmatprep.subr.mxu0 0.0
        %577 = vmatpush1.msra.mxu0 %v570
        %578 = vmatprep.subr.mxu0 0.0
        %579 = vmatpush1.msra.mxu0 0.0
        %580 = vmatprep.subr.mxu0 0.0
        %581 = vmatpush1.msra.mxu0 0.0
        %582 = vmatprep.subr.mxu0 0.0
        %583 = vmatpush1.msra.mxu0 0.0
        %584 = vmatprep.subr.mxu0 0.0
        %585 = vmatpush1.msra.mxu0 0.0
        %586 = vmatprep.subr.mxu0 0.0
        %587 = vmatpush1.msra.mxu0 0.0
        %588 = vmatprep.subr.mxu0 0.0
        %589 = vmatpush1.msra.mxu0 0.0
        %590 = vmatprep.subr.mxu0 0.0
        %591 = vmatpush1.msra.mxu0 0.0
        %592 = vmatprep.subr.mxu0 0.0
        %593 = vmatpush1.msra.mxu0 0.0
        %594 = vmatprep.subr.mxu0 0.0
        %595 = vmatpush1.msra.mxu0 0.0
        %596 = vmatprep.subr.mxu0 0.0
        %597 = vmatpush1.msra.mxu0 0.0
        %598 = vmatprep.subr.mxu0 0.0
        %599 = vmatpush1.msra.mxu0 0.0
        %600 = vmatprep.subr.mxu0 0.0
        %601 = vmatpush1.msra.mxu0 0.0
        %602 = vmatprep.subr.mxu0 0.0
        %603 = vmatpush1.msra.mxu0 0.0
        %604 = vmatprep.subr.mxu0 0.0
        %605 = vmatpush1.msra.mxu0 0.0
        %606 = vmatprep.subr.mxu0 0.0
        %607 = vmatpush1.msra.mxu0 0.0
        %608 = vmatprep.subr.mxu0 0.0
        %609 = vmatpush1.msra.mxu0 0.0
        %610 = vmatprep.subr.mxu0 0.0
        %611 = vmatpush1.msra.mxu0 0.0
        %612 = vmatprep.subr.mxu0 0.0
        %613 = vmatpush1.msra.mxu0 0.0
        %614 = vmatprep.subr.mxu0 0.0
        %615 = vmatpush1.msra.mxu0 0.0
        %616 = vmatprep.subr.mxu0 0.0
        %617 = vmatpush1.msra.mxu0 0.0
        %618 = vmatprep.subr.mxu0 0.0
        %619 = vmatpush1.msra.mxu0 0.0
        %620 = vmatprep.subr.mxu0 0.0
        %621 = vmatpush1.msra.mxu0 0.0
        %622 = vmatprep.subr.mxu0 0.0
        %623 = vmatpush1.msra.mxu0 0.0
        %624 = vmatprep.subr.mxu0 0.0
        %625 = vmatpush1.msra.mxu0 0.0
        %626 = vmatprep.subr.mxu0 0.0
        %627 = vmatpush1.msra.mxu0 0.0
        %628 = vmatprep.subr.mxu0 0.0
        %629 = vmatpush1.msra.mxu0 0.0
        %630 = vmatprep.subr.mxu0 0.0
        %631 = vmatpush1.msra.mxu0 0.0
        %632 = vmatprep.subr.mxu0 0.0
        %633 = vmatpush1.msra.mxu0 0.0
        %634 = vmatprep.subr.mxu0 0.0
        %635 = vmatpush1.msra.mxu0 0.0
        %636 = vmatprep.subr.mxu0 0.0
        %637 = vmatpush1.msra.mxu0 0.0
        %638 = vmatprep.subr.mxu0 0.0
        %639 = vmatpush1.msra.mxu0 0.0
        %640 = vmatprep.mubr.f32.mxu0 0.0
        %641 = vmatmul.mubr.f32.gmra.mrb[0].mxu0 %v574
        %v642 = vpop.f32.mrb[0].mxu0
        %v643 = vadd.f32 0.0, %v642
        %v644 = vpop.f32.mrb[0].mxu0
        %645 = vdwg.mxu0
        %s646 = scalar_lea.vmem %s297, 12 [#allocation9]
        %647 = vst [vmem:[%s646] sm:$0x7] %v643
        %v648 = vld [vmem:[%s249 + $0x4] sm:$0x1]
        %v649 = vlaneseq
        %v650 = vshrl.u32 %v649, 7
        %v651 = vsub.s32 0, %v650
        %v652 = vrot.slane %v648, %v651
        %vm653 = vcmp.eq.s32.totalorder %v301, %v652
        %v654 = vsel %vm653, %v311, %v312
        %s655 = scalar_lea.vmem %s240, 16 [#allocation2]
        %v656 = vld [vmem:[%s655] sm:$0x7]
        %v658 = vsel %vm321, %v656, 0
        %660 = vmatprep.subr.mxu0 0.0
        %661 = vmatpush1.msra.mxu0 %v654
        %662 = vmatprep.subr.mxu0 0.0
        %663 = vmatpush1.msra.mxu0 0.0
        %664 = vmatprep.subr.mxu0 0.0
        %665 = vmatpush1.msra.mxu0 0.0
        %666 = vmatprep.subr.mxu0 0.0
        %667 = vmatpush1.msra.mxu0 0.0
        %668 = vmatprep.subr.mxu0 0.0
        %669 = vmatpush1.msra.mxu0 0.0
        %670 = vmatprep.subr.mxu0 0.0
        %671 = vmatpush1.msra.mxu0 0.0
        %672 = vmatprep.subr.mxu0 0.0
        %673 = vmatpush1.msra.mxu0 0.0
        %674 = vmatprep.subr.mxu0 0.0
        %675 = vmatpush1.msra.mxu0 0.0
        %676 = vmatprep.subr.mxu0 0.0
        %677 = vmatpush1.msra.mxu0 0.0
        %678 = vmatprep.subr.mxu0 0.0
        %679 = vmatpush1.msra.mxu0 0.0
        %680 = vmatprep.subr.mxu0 0.0
        %681 = vmatpush1.msra.mxu0 0.0
        %682 = vmatprep.subr.mxu0 0.0
        %683 = vmatpush1.msra.mxu0 0.0
        %684 = vmatprep.subr.mxu0 0.0
        %685 = vmatpush1.msra.mxu0 0.0
        %686 = vmatprep.subr.mxu0 0.0
        %687 = vmatpush1.msra.mxu0 0.0
        %688 = vmatprep.subr.mxu0 0.0
        %689 = vmatpush1.msra.mxu0 0.0
        %690 = vmatprep.subr.mxu0 0.0
        %691 = vmatpush1.msra.mxu0 0.0
        %692 = vmatprep.subr.mxu0 0.0
        %693 = vmatpush1.msra.mxu0 0.0
        %694 = vmatprep.subr.mxu0 0.0
        %695 = vmatpush1.msra.mxu0 0.0
        %696 = vmatprep.subr.mxu0 0.0
        %697 = vmatpush1.msra.mxu0 0.0
        %698 = vmatprep.subr.mxu0 0.0
        %699 = vmatpush1.msra.mxu0 0.0
        %700 = vmatprep.subr.mxu0 0.0
        %701 = vmatpush1.msra.mxu0 0.0
        %702 = vmatprep.subr.mxu0 0.0
        %703 = vmatpush1.msra.mxu0 0.0
        %704 = vmatprep.subr.mxu0 0.0
        %705 = vmatpush1.msra.mxu0 0.0
        %706 = vmatprep.subr.mxu0 0.0
        %707 = vmatpush1.msra.mxu0 0.0
        %708 = vmatprep.subr.mxu0 0.0
        %709 = vmatpush1.msra.mxu0 0.0
        %710 = vmatprep.subr.mxu0 0.0
        %711 = vmatpush1.msra.mxu0 0.0
        %712 = vmatprep.subr.mxu0 0.0
        %713 = vmatpush1.msra.mxu0 0.0
        %714 = vmatprep.subr.mxu0 0.0
        %715 = vmatpush1.msra.mxu0 0.0
        %716 = vmatprep.subr.mxu0 0.0
        %717 = vmatpush1.msra.mxu0 0.0
        %718 = vmatprep.subr.mxu0 0.0
        %719 = vmatpush1.msra.mxu0 0.0
        %720 = vmatprep.subr.mxu0 0.0
        %721 = vmatpush1.msra.mxu0 0.0
        %722 = vmatprep.subr.mxu0 0.0
        %723 = vmatpush1.msra.mxu0 0.0
        %724 = vmatprep.mubr.f32.mxu0 0.0
        %725 = vmatmul.mubr.f32.gmra.mrb[0].mxu0 %v658
        %v726 = vpop.f32.mrb[0].mxu0
        %v727 = vadd.f32 0.0, %v726
        %v728 = vpop.f32.mrb[0].mxu0
        %729 = vdwg.mxu0
        %s730 = scalar_lea.vmem %s297, 16 [#allocation9]
        %731 = vst [vmem:[%s730] sm:$0x7] %v727
        %v732 = vld [vmem:[%s249 + $0x5] sm:$0x1]
        %v733 = vlaneseq
        %v734 = vshrl.u32 %v733, 7
        %v735 = vsub.s32 0, %v734
        %v736 = vrot.slane %v732, %v735
        %vm737 = vcmp.eq.s32.totalorder %v301, %v736
        %v738 = vsel %vm737, %v311, %v312
        %s739 = scalar_lea.vmem %s240, 20 [#allocation2]
        %v740 = vld [vmem:[%s739] sm:$0x7]
        %v742 = vsel %vm321, %v740, 0
        %744 = vmatprep.subr.mxu0 0.0
        %745 = vmatpush1.msra.mxu0 %v738
        %746 = vmatprep.subr.mxu0 0.0
        %747 = vmatpush1.msra.mxu0 0.0
        %748 = vmatprep.subr.mxu0 0.0
        %749 = vmatpush1.msra.mxu0 0.0
        %750 = vmatprep.subr.mxu0 0.0
        %751 = vmatpush1.msra.mxu0 0.0
        %752 = vmatprep.subr.mxu0 0.0
        %753 = vmatpush1.msra.mxu0 0.0
        %754 = vmatprep.subr.mxu0 0.0
        %755 = vmatpush1.msra.mxu0 0.0
        %756 = vmatprep.subr.mxu0 0.0
        %757 = vmatpush1.msra.mxu0 0.0
        %758 = vmatprep.subr.mxu0 0.0
        %759 = vmatpush1.msra.mxu0 0.0
        %760 = vmatprep.subr.mxu0 0.0
        %761 = vmatpush1.msra.mxu0 0.0
        %762 = vmatprep.subr.mxu0 0.0
        %763 = vmatpush1.msra.mxu0 0.0
        %764 = vmatprep.subr.mxu0 0.0
        %765 = vmatpush1.msra.mxu0 0.0
        %766 = vmatprep.subr.mxu0 0.0
        %767 = vmatpush1.msra.mxu0 0.0
        %768 = vmatprep.subr.mxu0 0.0
        %769 = vmatpush1.msra.mxu0 0.0
        %770 = vmatprep.subr.mxu0 0.0
        %771 = vmatpush1.msra.mxu0 0.0
        %772 = vmatprep.subr.mxu0 0.0
        %773 = vmatpush1.msra.mxu0 0.0
        %774 = vmatprep.subr.mxu0 0.0
        %775 = vmatpush1.msra.mxu0 0.0
        %776 = vmatprep.subr.mxu0 0.0
        %777 = vmatpush1.msra.mxu0 0.0
        %778 = vmatprep.subr.mxu0 0.0
        %779 = vmatpush1.msra.mxu0 0.0
        %780 = vmatprep.subr.mxu0 0.0
        %781 = vmatpush1.msra.mxu0 0.0
        %782 = vmatprep.subr.mxu0 0.0
        %783 = vmatpush1.msra.mxu0 0.0
        %784 = vmatprep.subr.mxu0 0.0
        %785 = vmatpush1.msra.mxu0 0.0
        %786 = vmatprep.subr.mxu0 0.0
        %787 = vmatpush1.msra.mxu0 0.0
        %788 = vmatprep.subr.mxu0 0.0
        %789 = vmatpush1.msra.mxu0 0.0
        %790 = vmatprep.subr.mxu0 0.0
        %791 = vmatpush1.msra.mxu0 0.0
        %792 = vmatprep.subr.mxu0 0.0
        %793 = vmatpush1.msra.mxu0 0.0
        %794 = vmatprep.subr.mxu0 0.0
        %795 = vmatpush1.msra.mxu0 0.0
        %796 = vmatprep.subr.mxu0 0.0
        %797 = vmatpush1.msra.mxu0 0.0
        %798 = vmatprep.subr.mxu0 0.0
        %799 = vmatpush1.msra.mxu0 0.0
        %800 = vmatprep.subr.mxu0 0.0
        %801 = vmatpush1.msra.mxu0 0.0
        %802 = vmatprep.subr.mxu0 0.0
        %803 = vmatpush1.msra.mxu0 0.0
        %804 = vmatprep.subr.mxu0 0.0
        %805 = vmatpush1.msra.mxu0 0.0
        %806 = vmatprep.subr.mxu0 0.0
        %807 = vmatpush1.msra.mxu0 0.0
        %808 = vmatprep.mubr.f32.mxu0 0.0
        %809 = vmatmul.mubr.f32.gmra.mrb[0].mxu0 %v742
        %v810 = vpop.f32.mrb[0].mxu0
        %v811 = vadd.f32 0.0, %v810
        %v812 = vpop.f32.mrb[0].mxu0
        %813 = vdwg.mxu0
        %s814 = scalar_lea.vmem %s297, 20 [#allocation9]
        %815 = vst [vmem:[%s814] sm:$0x7] %v811
        %v816 = vld [vmem:[%s249 + $0x6] sm:$0x1]
        %v817 = vlaneseq
        %v818 = vshrl.u32 %v817, 7
        %v819 = vsub.s32 0, %v818
        %v820 = vrot.slane %v816, %v819
        %vm821 = vcmp.eq.s32.totalorder %v301, %v820
        %v822 = vsel %vm821, %v311, %v312
        %s823 = scalar_lea.vmem %s240, 24 [#allocation2]
        %v824 = vld [vmem:[%s823] sm:$0x7]
        %v826 = vsel %vm321, %v824, 0
        %828 = vmatprep.subr.mxu0 0.0
        %829 = vmatpush1.msra.mxu0 %v822
        %830 = vmatprep.subr.mxu0 0.0
        %831 = vmatpush1.msra.mxu0 0.0
        %832 = vmatprep.subr.mxu0 0.0
        %833 = vmatpush1.msra.mxu0 0.0
        %834 = vmatprep.subr.mxu0 0.0
        %835 = vmatpush1.msra.mxu0 0.0
        %836 = vmatprep.subr.mxu0 0.0
        %837 = vmatpush1.msra.mxu0 0.0
        %838 = vmatprep.subr.mxu0 0.0
        %839 = vmatpush1.msra.mxu0 0.0
        %840 = vmatprep.subr.mxu0 0.0
        %841 = vmatpush1.msra.mxu0 0.0
        %842 = vmatprep.subr.mxu0 0.0
        %843 = vmatpush1.msra.mxu0 0.0
        %844 = vmatprep.subr.mxu0 0.0
        %845 = vmatpush1.msra.mxu0 0.0
        %846 = vmatprep.subr.mxu0 0.0
        %847 = vmatpush1.msra.mxu0 0.0
        %848 = vmatprep.subr.mxu0 0.0
        %849 = vmatpush1.msra.mxu0 0.0
        %850 = vmatprep.subr.mxu0 0.0
        %851 = vmatpush1.msra.mxu0 0.0
        %852 = vmatprep.subr.mxu0 0.0
        %853 = vmatpush1.msra.mxu0 0.0
        %854 = vmatprep.subr.mxu0 0.0
        %855 = vmatpush1.msra.mxu0 0.0
        %856 = vmatprep.subr.mxu0 0.0
        %857 = vmatpush1.msra.mxu0 0.0
        %858 = vmatprep.subr.mxu0 0.0
        %859 = vmatpush1.msra.mxu0 0.0
        %860 = vmatprep.subr.mxu0 0.0
        %861 = vmatpush1.msra.mxu0 0.0
        %862 = vmatprep.subr.mxu0 0.0
        %863 = vmatpush1.msra.mxu0 0.0
        %864 = vmatprep.subr.mxu0 0.0
        %865 = vmatpush1.msra.mxu0 0.0
        %866 = vmatprep.subr.mxu0 0.0
        %867 = vmatpush1.msra.mxu0 0.0
        %868 = vmatprep.subr.mxu0 0.0
        %869 = vmatpush1.msra.mxu0 0.0
        %870 = vmatprep.subr.mxu0 0.0
        %871 = vmatpush1.msra.mxu0 0.0
        %872 = vmatprep.subr.mxu0 0.0
        %873 = vmatpush1.msra.mxu0 0.0
        %874 = vmatprep.subr.mxu0 0.0
        %875 = vmatpush1.msra.mxu0 0.0
        %876 = vmatprep.subr.mxu0 0.0
        %877 = vmatpush1.msra.mxu0 0.0
        %878 = vmatprep.subr.mxu0 0.0
        %879 = vmatpush1.msra.mxu0 0.0
        %880 = vmatprep.subr.mxu0 0.0
        %881 = vmatpush1.msra.mxu0 0.0
        %882 = vmatprep.subr.mxu0 0.0
        %883 = vmatpush1.msra.mxu0 0.0
        %884 = vmatprep.subr.mxu0 0.0
        %885 = vmatpush1.msra.mxu0 0.0
        %886 = vmatprep.subr.mxu0 0.0
        %887 = vmatpush1.msra.mxu0 0.0
        %888 = vmatprep.subr.mxu0 0.0
        %889 = vmatpush1.msra.mxu0 0.0
        %890 = vmatprep.subr.mxu0 0.0
        %891 = vmatpush1.msra.mxu0 0.0
        %892 = vmatprep.mubr.f32.mxu0 0.0
        %893 = vmatmul.mubr.f32.gmra.mrb[0].mxu0 %v826
        %v894 = vpop.f32.mrb[0].mxu0
        %v895 = vadd.f32 0.0, %v894
        %v896 = vpop.f32.mrb[0].mxu0
        %897 = vdwg.mxu0
        %s898 = scalar_lea.vmem %s297, 24 [#allocation9]
        %899 = vst [vmem:[%s898] sm:$0x7] %v895
        %v900 = vld [vmem:[%s249 + $0x7] sm:$0x1]
        %v901 = vlaneseq
        %v902 = vshrl.u32 %v901, 7
        %v903 = vsub.s32 0, %v902
        %v904 = vrot.slane %v900, %v903
        %vm905 = vcmp.eq.s32.totalorder %v301, %v904
        %v906 = vsel %vm905, %v311, %v312
        %s907 = scalar_lea.vmem %s240, 28 [#allocation2]
        %v908 = vld [vmem:[%s907] sm:$0x7]
        %v910 = vsel %vm321, %v908, 0
        %912 = vmatprep.subr.mxu0 0.0
        %913 = vmatpush1.msra.mxu0 %v906
        %914 = vmatprep.subr.mxu0 0.0
        %915 = vmatpush1.msra.mxu0 0.0
        %916 = vmatprep.subr.mxu0 0.0
        %917 = vmatpush1.msra.mxu0 0.0
        %918 = vmatprep.subr.mxu0 0.0
        %919 = vmatpush1.msra.mxu0 0.0
        %920 = vmatprep.subr.mxu0 0.0
        %921 = vmatpush1.msra.mxu0 0.0
        %922 = vmatprep.subr.mxu0 0.0
        %923 = vmatpush1.msra.mxu0 0.0
        %924 = vmatprep.subr.mxu0 0.0
        %925 = vmatpush1.msra.mxu0 0.0
        %926 = vmatprep.subr.mxu0 0.0
        %927 = vmatpush1.msra.mxu0 0.0
        %928 = vmatprep.subr.mxu0 0.0
        %929 = vmatpush1.msra.mxu0 0.0
        %930 = vmatprep.subr.mxu0 0.0
        %931 = vmatpush1.msra.mxu0 0.0
        %932 = vmatprep.subr.mxu0 0.0
        %933 = vmatpush1.msra.mxu0 0.0
        %934 = vmatprep.subr.mxu0 0.0
        %935 = vmatpush1.msra.mxu0 0.0
        %936 = vmatprep.subr.mxu0 0.0
        %937 = vmatpush1.msra.mxu0 0.0
        %938 = vmatprep.subr.mxu0 0.0
        %939 = vmatpush1.msra.mxu0 0.0
        %940 = vmatprep.subr.mxu0 0.0
        %941 = vmatpush1.msra.mxu0 0.0
        %942 = vmatprep.subr.mxu0 0.0
        %943 = vmatpush1.msra.mxu0 0.0
        %944 = vmatprep.subr.mxu0 0.0
        %945 = vmatpush1.msra.mxu0 0.0
        %946 = vmatprep.subr.mxu0 0.0
        %947 = vmatpush1.msra.mxu0 0.0
        %948 = vmatprep.subr.mxu0 0.0
        %949 = vmatpush1.msra.mxu0 0.0
        %950 = vmatprep.subr.mxu0 0.0
        %951 = vmatpush1.msra.mxu0 0.0
        %952 = vmatprep.subr.mxu0 0.0
        %953 = vmatpush1.msra.mxu0 0.0
        %954 = vmatprep.subr.mxu0 0.0
        %955 = vmatpush1.msra.mxu0 0.0
        %956 = vmatprep.subr.mxu0 0.0
        %957 = vmatpush1.msra.mxu0 0.0
        %958 = vmatprep.subr.mxu0 0.0
        %959 = vmatpush1.msra.mxu0 0.0
        %960 = vmatprep.subr.mxu0 0.0
        %961 = vmatpush1.msra.mxu0 0.0
        %962 = vmatprep.subr.mxu0 0.0
        %963 = vmatpush1.msra.mxu0 0.0
        %964 = vmatprep.subr.mxu0 0.0
        %965 = vmatpush1.msra.mxu0 0.0
        %966 = vmatprep.subr.mxu0 0.0
        %967 = vmatpush1.msra.mxu0 0.0
        %968 = vmatprep.subr.mxu0 0.0
        %969 = vmatpush1.msra.mxu0 0.0
        %970 = vmatprep.subr.mxu0 0.0
        %971 = vmatpush1.msra.mxu0 0.0
        %972 = vmatprep.subr.mxu0 0.0
        %973 = vmatpush1.msra.mxu0 0.0
        %974 = vmatprep.subr.mxu0 0.0
        %975 = vmatpush1.msra.mxu0 0.0
        %976 = vmatprep.mubr.f32.mxu0 0.0
        %977 = vmatmul.mubr.f32.gmra.mrb[0].mxu0 %v910
        %v978 = vpop.f32.mrb[0].mxu0
        %v979 = vadd.f32 0.0, %v978
        %v980 = vpop.f32.mrb[0].mxu0
        %981 = vdwg.mxu0
        %s982 = scalar_lea.vmem %s297, 28 [#allocation9]
        %983 = vst [vmem:[%s982] sm:$0x7] %v979
        %v984 = vld [vmem:[%s297] sm:$0x7]
        %v985 = vld [vmem:[%s297 + $0x4] sm:$0x7]
        %v986 = vld [vmem:[%s297 + $0x8] sm:$0x7]
        %v987 = vld [vmem:[%s297 + $0xc] sm:$0x7]
        %v988 = vld [vmem:[%s297 + $0x10] sm:$0x7]
        %v989 = vld [vmem:[%s297 + $0x14] sm:$0x7]
        %v990 = vld [vmem:[%s297 + $0x18] sm:$0x7]
        %v991 = vld [vmem:[%s297 + $0x1c] sm:$0x7]
        %v992 = vmul.f32 %v984, %v984
        %v993 = vmul.f32 %v985, %v985
        %v994 = vmul.f32 %v986, %v986
        %v995 = vmul.f32 %v987, %v987
        %v996 = vmul.f32 %v988, %v988
        %v997 = vmul.f32 %v989, %v989
        %v998 = vmul.f32 %v990, %v990
        %v999 = vmul.f32 %v991, %v991
        %v1008 = vrot.slane %v992, 1
        %v1009 = vrot.slane %v993, 1
        %v1010 = vrot.slane %v994, 1
        %v1011 = vrot.slane %v995, 1
        %v1012 = vrot.slane %v996, 1
        %v1013 = vrot.slane %v997, 1
        %v1014 = vrot.slane %v998, 1
        %v1015 = vrot.slane %v999, 1
        %v1024 = vadd.f32 %v992, %v1008
        %v1025 = vadd.f32 %v993, %v1009
        %v1026 = vadd.f32 %v994, %v1010
        %v1027 = vadd.f32 %v995, %v1011
        %v1028 = vadd.f32 %v996, %v1012
        %v1029 = vadd.f32 %v997, %v1013
        %v1030 = vadd.f32 %v998, %v1014
        %v1031 = vadd.f32 %v999, %v1015
        %v1032 = vrot.slane %v992, 2
        %v1033 = vrot.slane %v993, 2
        %v1034 = vrot.slane %v994, 2
        %v1035 = vrot.slane %v995, 2
        %v1036 = vrot.slane %v996, 2
        %v1037 = vrot.slane %v997, 2
        %v1038 = vrot.slane %v998, 2
        %v1039 = vrot.slane %v999, 2
        %v1048 = vadd.f32 %v1024, %v1032
        %v1049 = vadd.f32 %v1025, %v1033
        %v1050 = vadd.f32 %v1026, %v1034
        %v1051 = vadd.f32 %v1027, %v1035
        %v1052 = vadd.f32 %v1028, %v1036
        %v1053 = vadd.f32 %v1029, %v1037
        %v1054 = vadd.f32 %v1030, %v1038
        %v1055 = vadd.f32 %v1031, %v1039
        %v1056 = vrsqrt.pop %v1048
        %v1057 = vmul.f32 %v1048, %v1056
        %vm1058 = vcmp.eq.f32.partialorder %v1048, inf
        %v1059 = vsel %vm1058, %v1048, %v1057
        %vm1060 = vcmp.eq.f32.partialorder %v1048, 0.0
        %v1061 = vand.u32 %v1048, 2147483648
        %v1062 = vsel %vm1060, %v1061, %v1059
        %v1063 = vrsqrt.pop %v1049
        %v1064 = vmul.f32 %v1049, %v1063
        %vm1065 = vcmp.eq.f32.partialorder %v1049, inf
        %v1066 = vsel %vm1065, %v1049, %v1064
        %vm1067 = vcmp.eq.f32.partialorder %v1049, 0.0
        %v1068 = vand.u32 %v1049, 2147483648
        %v1069 = vsel %vm1067, %v1068, %v1066
        %v1070 = vrsqrt.pop %v1050
        %v1071 = vmul.f32 %v1050, %v1070
        %vm1072 = vcmp.eq.f32.partialorder %v1050, inf
        %v1073 = vsel %vm1072, %v1050, %v1071
        %vm1074 = vcmp.eq.f32.partialorder %v1050, 0.0
        %v1075 = vand.u32 %v1050, 2147483648
        %v1076 = vsel %vm1074, %v1075, %v1073
        %v1077 = vrsqrt.pop %v1051
        %v1078 = vmul.f32 %v1051, %v1077
        %vm1079 = vcmp.eq.f32.partialorder %v1051, inf
        %v1080 = vsel %vm1079, %v1051, %v1078
        %vm1081 = vcmp.eq.f32.partialorder %v1051, 0.0
        %v1082 = vand.u32 %v1051, 2147483648
        %v1083 = vsel %vm1081, %v1082, %v1080
        %v1084 = vrsqrt.pop %v1052
        %v1085 = vmul.f32 %v1052, %v1084
        %vm1086 = vcmp.eq.f32.partialorder %v1052, inf
        %v1087 = vsel %vm1086, %v1052, %v1085
        %vm1088 = vcmp.eq.f32.partialorder %v1052, 0.0
        %v1089 = vand.u32 %v1052, 2147483648
        %v1090 = vsel %vm1088, %v1089, %v1087
        %v1091 = vrsqrt.pop %v1053
        %v1092 = vmul.f32 %v1053, %v1091
        %vm1093 = vcmp.eq.f32.partialorder %v1053, inf
        %v1094 = vsel %vm1093, %v1053, %v1092
        %vm1095 = vcmp.eq.f32.partialorder %v1053, 0.0
        %v1096 = vand.u32 %v1053, 2147483648
        %v1097 = vsel %vm1095, %v1096, %v1094
        %v1098 = vrsqrt.pop %v1054
        %v1099 = vmul.f32 %v1054, %v1098
        %vm1100 = vcmp.eq.f32.partialorder %v1054, inf
        %v1101 = vsel %vm1100, %v1054, %v1099
        %vm1102 = vcmp.eq.f32.partialorder %v1054, 0.0
        %v1103 = vand.u32 %v1054, 2147483648
        %v1104 = vsel %vm1102, %v1103, %v1101
        %v1105 = vrsqrt.pop %v1055
        %v1106 = vmul.f32 %v1055, %v1105
        %vm1107 = vcmp.eq.f32.partialorder %v1055, inf
        %v1108 = vsel %vm1107, %v1055, %v1106
        %vm1109 = vcmp.eq.f32.partialorder %v1055, 0.0
        %v1110 = vand.u32 %v1055, 2147483648
        %v1111 = vsel %vm1109, %v1110, %v1108
        %v1112 = vld [vmem:[%s258] sm:$0xff]
        %vm1113 = vcmp.ne.s32.totalorder %v1112, 0
        %v1122 = vrot.slane %v1069, 7
        %vm1123 = vcmask 1041409
        %v1124 = vsel %vm1123, %v1122, %v1062
        %v1125 = vrot.slane %v1076, 6
        %vm1126 = vcmask 1042434
        %v1127 = vsel %vm1126, %v1125, %v1124
        %v1128 = vrot.slane %v1083, 5
        %vm1129 = vcmask 1043459
        %v1130 = vsel %vm1129, %v1128, %v1127
        %v1131 = vrot.slane %v1090, 4
        %vm1132 = vcmask 1044484
        %v1133 = vsel %vm1132, %v1131, %v1130
        %v1134 = vrot.slane %v1097, 3
        %vm1135 = vcmask 1045509
        %v1136 = vsel %vm1135, %v1134, %v1133
        %v1137 = vrot.slane %v1104, 2
        %vm1138 = vcmask 1046534
        %v1139 = vsel %vm1138, %v1137, %v1136
        %v1140 = vrot.slane %v1111, 1
        %vm1141 = vcmask 1047559
        %v1142 = vsel %vm1141, %v1140, %v1139
        %v1144 = vsel %vm1113, %v1142, 0.0
        %1145 = vst [vmem:[%s290] sm:$0xff] %v1144
        %v1146 = vadd.f32 %v1144, 1e-08
        %v1147 = vsel %vm1113, %v1146, 1.0
        %v1148 = vrcp.pop %v1147
        %v1150 = vcombine.high %v1148, %v1148
        %v1152 = vunpack.c.l.s4 1966171168
        %v1153 = vunpack.c.0.s8 %v1152
        %v1154 = vlaneseq
        %v1155 = vshrl.u32 %v1154, 7
        %v1156 = vsub.s32 %v1153, %v1155
        %v1157 = vrot.slane %v1148, %v1156
        %v1159 = vunpack.c.l.s4 1966171168
        %v1160 = vunpack.c.0.s8 %v1159
        %v1161 = vlaneseq
        %v1162 = vshrl.u32 %v1161, 7
        %v1163 = vsub.s32 %v1160, %v1162
        %v1164 = vrot.slane %v1150, %v1163
        %v1165 = vcombine.high %v1157, %v1157
        %v1166 = vcombine.high %v1164, %v1164
        %v1168 = vunpack.c.l.s4 1966171168
        %v1169 = vunpack.c.0.s8 %v1168
        %v1170 = vlaneseq
        %v1171 = vshrl.u32 %v1170, 7
        %v1172 = vsub.s32 %v1169, %v1171
        %v1173 = vrot.slane %v1157, %v1172
        %v1175 = vunpack.c.l.s4 1966171168
        %v1176 = vunpack.c.0.s8 %v1175
        %v1177 = vlaneseq
        %v1178 = vshrl.u32 %v1177, 7
        %v1179 = vsub.s32 %v1176, %v1178
        %v1180 = vrot.slane %v1164, %v1179
        %v1182 = vunpack.c.l.s4 1966171168
        %v1183 = vunpack.c.0.s8 %v1182
        %v1184 = vlaneseq
        %v1185 = vshrl.u32 %v1184, 7
        %v1186 = vsub.s32 %v1183, %v1185
        %v1187 = vrot.slane %v1165, %v1186
        %v1189 = vunpack.c.l.s4 1966171168
        %v1190 = vunpack.c.0.s8 %v1189
        %v1191 = vlaneseq
        %v1192 = vshrl.u32 %v1191, 7
        %v1193 = vsub.s32 %v1190, %v1192
        %v1194 = vrot.slane %v1166, %v1193
        %v1195 = vcombine.high %v1173, %v1173
        %v1196 = vcombine.high %v1180, %v1180
        %v1197 = vcombine.high %v1187, %v1187
        %v1198 = vcombine.high %v1194, %v1194
        %v1199 = vlaneseq
        %v1200 = vshrl.u32 %v1199, 7
        %v1201 = vsub.s32 0, %v1200
        %v1202 = vrot.slane %v1173, %v1201
        %v1203 = vlaneseq
        %v1204 = vshrl.u32 %v1203, 7
        %v1205 = vsub.s32 0, %v1204
        %v1206 = vrot.slane %v1187, %v1205
        %v1207 = vlaneseq
        %v1208 = vshrl.u32 %v1207, 7
        %v1209 = vsub.s32 0, %v1208
        %v1210 = vrot.slane %v1195, %v1209
        %v1211 = vlaneseq
        %v1212 = vshrl.u32 %v1211, 7
        %v1213 = vsub.s32 0, %v1212
        %v1214 = vrot.slane %v1197, %v1213
        %v1215 = vlaneseq
        %v1216 = vshrl.u32 %v1215, 7
        %v1217 = vsub.s32 0, %v1216
        %v1218 = vrot.slane %v1180, %v1217
        %v1219 = vlaneseq
        %v1220 = vshrl.u32 %v1219, 7
        %v1221 = vsub.s32 0, %v1220
        %v1222 = vrot.slane %v1194, %v1221
        %v1223 = vlaneseq
        %v1224 = vshrl.u32 %v1223, 7
        %v1225 = vsub.s32 0, %v1224
        %v1226 = vrot.slane %v1196, %v1225
        %v1227 = vlaneseq
        %v1228 = vshrl.u32 %v1227, 7
        %v1229 = vsub.s32 0, %v1228
        %v1230 = vrot.slane %v1198, %v1229
        %v1239 = vmul.f32 %v984, %v1202
        %v1240 = vmul.f32 %v985, %v1206
        %v1241 = vmul.f32 %v986, %v1210
        %v1242 = vmul.f32 %v987, %v1214
        %v1243 = vmul.f32 %v988, %v1218
        %v1244 = vmul.f32 %v989, %v1222
        %v1245 = vmul.f32 %v990, %v1226
        %v1246 = vmul.f32 %v991, %v1230
        %1247 = vst [vmem:[%s297] sm:$0x7] %v1239
        %1248 = vst [vmem:[%s297 + $0x4] sm:$0x7] %v1240
        %1249 = vst [vmem:[%s297 + $0x8] sm:$0x7] %v1241
        %1250 = vst [vmem:[%s297 + $0xc] sm:$0x7] %v1242
        %1251 = vst [vmem:[%s297 + $0x10] sm:$0x7] %v1243
        %1252 = vst [vmem:[%s297 + $0x14] sm:$0x7] %v1244
        %1253 = vst [vmem:[%s297 + $0x18] sm:$0x7] %v1245
        %1254 = vst [vmem:[%s297 + $0x1c] sm:$0x7] %v1246
        %s1255 = sand.u32 %s114, 1
        %s1256 = scalar_lea.sflag [#allocation4], %s1255
        %s1257 = sand.u32 %s114, 1
        %s1258 = smul.addr %s1257, 8
        %s1259 = scalar_lea.vmem [#allocation8], %s1258
        %s1260 = sand.u32 %s140, 1
        %s1261 = scalar_lea.sflag [#allocation10], %s1260
        %s1262 = sand.u32 %s140, 1
        %s1263 = smul.addr %s1262, 32
        %s1264 = scalar_lea.vmem [#allocation9], %s1263
        // Predicated region
        $region45: #{tpu_custom_call.1} parent=31 // pred_check
          %p1265 = pneg %p124
        $region46: #{tpu_custom_call.1} parent=31 // pred_check_branch
          %1267 = sbr.rel (%p1265) target = $region48
        $region47: #{tpu_custom_call.1} parent=31 // pred_region
          %s1269 = ssub.s32 128, 128
          %1270 = vsyncadd %s1256, %s1269
          %s1271 = smul.addr %s28, 128
          %s1272 = scalar_lea.hbm %s3, %s1271
          %s1274 = sshll.u32 %s1259, 4
          %s1275 = int_to_ptr.vmem [resolvable:$true] %s1274
          %1277 = dma.vmem_to_hbm [thread:$0]  %s1275, 128, %s1272, %s1256
        $region48: #{tpu_custom_call.1} parent=31 // pred_fallthru
          _
        // Predicated region
        $region49: #{tpu_custom_call.1} parent=31 // pred_check
          %p1278 = pneg %p150
        $region50: #{tpu_custom_call.1} parent=31 // pred_check_branch
          %1280 = sbr.rel (%p1278) target = $region52
        $region51: #{tpu_custom_call.1} parent=31 // pred_region
          %s1281 = smul.u32 8, %s28
          %s1283 = ssub.s32 512, 512
          %1284 = vsyncadd %s1261, %s1283
          %s1285 = smul.addr %s1281, 64
          %s1286 = scalar_lea.hbm %s4, %s1285
          %s1287 = sshll.u32 %s1264, 4
          %s1288 = int_to_ptr.vmem [resolvable:$true] %s1287
          %1293 = dma.vmem_to_hbm [thread:$0]  %s1288, 512, %s1286, %s1261, 64, 64, 4
        $region52: #{tpu_custom_call.1} parent=31 // pred_fallthru
          _
      $region32: #{tpu_custom_call.1} parent=5 // pred_fallthru
        _
      %p1294 = scmp.le.s32.totalorder 2, %s23
      // Predicated region
      $region53: #{tpu_custom_call.1} parent=5 // pred_check
        %p1295 = pneg %p1294
      $region54: #{tpu_custom_call.1} parent=5 // pred_check_branch
        %1297 = sbr.rel (%p1295) target = $region56
      $region55: #{tpu_custom_call.1} parent=5 // pred_region
        %s1298 = ssub.s32 %s23, 2
        // Predicated region
        $region57: #{tpu_custom_call.1} parent=55 // pred_check
          %p1299 = pneg %p130
        $region58: #{tpu_custom_call.1} parent=55 // pred_check_branch
          %1301 = sbr.rel (%p1299) target = $region60
        $region59: #{tpu_custom_call.1} parent=55 // pred_region
          %s1302 = sand.u32 %s115, 1
          %s1303 = scalar_lea.sflag [#allocation4], %s1302
          %s1304 = sand.u32 %s115, 1
          %s1305 = smul.addr %s1304, 8
          %s1306 = scalar_lea.vmem [#allocation8], %s1305
          %1307 = dma.done %s1303, 128
        $region60: #{tpu_custom_call.1} parent=55 // pred_fallthru
          _
        // Predicated region
        $region61: #{tpu_custom_call.1} parent=55 // pred_check
          %p1308 = pneg %p156
        $region62: #{tpu_custom_call.1} parent=55 // pred_check_branch
          %1310 = sbr.rel (%p1308) target = $region64
        $region63: #{tpu_custom_call.1} parent=55 // pred_region
          %s1311 = sand.u32 %s141, 1
          %s1312 = scalar_lea.sflag [#allocation10], %s1311
          %s1313 = sand.u32 %s141, 1
          %s1314 = smul.addr %s1313, 32
          %s1315 = scalar_lea.vmem [#allocation9], %s1314
          %1316 = dma.done %s1312, 512
        $region64: #{tpu_custom_call.1} parent=55 // pred_fallthru
          _
      $region56: #{tpu_custom_call.1} parent=5 // pred_fallthru
        _
    $region6: #{tpu_custom_call.1} parent=1 // loop_footer
      %s27 = sadd.s32 1, %s23
    $region7: #{tpu_custom_call.1} parent=1 // loop_footer_branch
      %22 = sbr.rel target = $region3
    $region8: #{tpu_custom_call.1} parent=1 // loop_exit
      _
    %1317 = vsyncpa [#allocation3], 1
    %s1318 = scalar_lea.sflag [#allocation3], 1
    %1319 = vsyncpa %s1318, 1
    %1320 = vsyncpa [#allocation6], 1
    %s1321 = scalar_lea.sflag [#allocation6], 1
    %1322 = vsyncpa %s1321, 1
    %1323 = vsyncpa [#allocation4], 1
    %s1324 = scalar_lea.sflag [#allocation4], 1
    %1325 = vsyncpa %s1324, 1
    %1326 = vsyncpa [#allocation10], 1
    %s1327 = scalar_lea.sflag [#allocation10], 1
    %1328 = vsyncpa %s1327, 1

</llo_original>
